<compile_context>
chip_gen: v6e
topology: v6e:2x2x1
jax: 0.10.0
libtpu: 0.0.40
codegen_flags: <defaults>
</compile_context>

<pallas_src>
import jax
import jax.numpy as jnp
from jax.experimental import pallas as pl
from jax.experimental.pallas import tpu as pltpu

EPS = 1e-6
THRESHOLD = 0.5
LANE = 128


# ----------------------------------------------------------------------------
# Pallas kernel: per-tile, per-lane partial sums for masked L1, masked (1-IoU)
# and cross-entropy.
# ----------------------------------------------------------------------------
def _make_box_loss_kernel(p_valid, tile_rows, n_classes):
    """Returns a kernel closed over static sizes (p_valid = real #priors)."""

    def kernel(boxes_ref, labels_ref, logits_ref, out_ref):
        i = pl.program_id(0)

        # ---- lane-dense f32 box planes, each (tile_rows, 128) ----
        p_cx = boxes_ref[0]
        p_cy = boxes_ref[1]
        p_w = boxes_ref[2]
        p_h = boxes_ref[3]
        t_cx = boxes_ref[4]
        t_cy = boxes_ref[5]
        t_w = boxes_ref[6]
        t_h = boxes_ref[7]

        labels = labels_ref[...].astype(jnp.int32)            # (R, 128)
        pos = (labels != 0).astype(jnp.float32)               # positive priors

        # ---- L1 over positive priors (sum |diff| over 4 coords) ----
        l1 = (jnp.abs(p_cx - t_cx) + jnp.abs(p_cy - t_cy)
              + jnp.abs(p_w - t_w) + jnp.abs(p_h - t_h))

        # ---- (1 - IoU) over positive priors; exact divide, w/h unclamped ----
        px1 = p_cx - 0.5 * p_w
        px2 = p_cx + 0.5 * p_w
        py1 = p_cy - 0.5 * p_h
        py2 = p_cy + 0.5 * p_h
        tx1 = t_cx - 0.5 * t_w
        tx2 = t_cx + 0.5 * t_w
        ty1 = t_cy - 0.5 * t_h
        ty2 = t_cy + 0.5 * t_h
        iw = jnp.maximum(jnp.minimum(px2, tx2) - jnp.maximum(px1, tx1), 0.0)
        ih = jnp.maximum(jnp.minimum(py2, ty2) - jnp.maximum(py1, ty1), 0.0)
        inter = iw * ih
        union = p_w * p_h + t_w * t_h - inter
        one_minus_iou = 1.0 - inter / (union + EPS)

        # ---- cross-entropy over class-major lane-dense planes ----
        # Two passes over the bf16 planes (max, then sum-exp + label gather),
        # upcasting one (R, 128) plane at a time: no f32 (R,128,C) temporary.
        m = logits_ref[0].astype(jnp.float32)
        for c in range(1, n_classes):
            m = jnp.maximum(m, logits_ref[c].astype(jnp.float32))
        sum_exp = jnp.zeros((tile_rows, LANE), jnp.float32)
        picked = jnp.zeros((tile_rows, LANE), jnp.float32)
        for c in range(n_classes):
            plane = logits_ref[c].astype(jnp.float32)
            sum_exp = sum_exp + jnp.exp(plane - m)
            picked = jnp.where(labels == c, plane, picked)
        ce = jnp.log(sum_exp) + m - picked                     # (R, 128)

        # ---- per-lane partial sums (row-axis reduction only) ----
        out_ref[0, 0:1, :] = jnp.sum(l1 * pos, axis=0, keepdims=True)
        out_ref[0, 1:2, :] = jnp.sum(one_minus_iou * pos, axis=0, keepdims=True)
        out_ref[0, 2:3, :] = jnp.sum(pos, axis=0, keepdims=True)
        out_ref[0, 3:4, :] = jnp.sum(ce, axis=0, keepdims=True)
        out_ref[0, 4:8, :] = jnp.zeros((4, LANE), jnp.float32)

        # Only the last tile contains zero-padded tail priors: mask CE there.
        @pl.when(i == pl.num_programs(0) - 1)
        def _():
            row = jax.lax.broadcasted_iota(jnp.int32, (tile_rows, LANE), 0)
            lane = jax.lax.broadcasted_iota(jnp.int32, (tile_rows, LANE), 1)
            gidx = (i * tile_rows + row) * LANE + lane
            valid = (gidx < p_valid).astype(jnp.float32)
            out_ref[0, 3:4, :] = jnp.sum(ce * valid, axis=0, keepdims=True)

    return kernel


def box_losses_pallas(pred_locs, pred_cls, true_locs, true_classes, *,
                      tile_rows=512):
    """pred_locs (B,Np,4), pred_cls (B,Np,C), true_locs (B,Np,4) cxcywh,
    true_classes (B,Np) int  ->  (loc_loss, cross_loss, iou_loss)."""
    B, Np, _ = pred_locs.shape
    C = pred_cls.shape[-1]
    P = B * Np

    n_rows_min = pl.cdiv(P, LANE)

    # Per-128-prior-row HBM footprint: 8 f32 box planes + C logits + 1 label.
    label_dtype = jnp.int8 if C <= 127 else jnp.int32
    bytes_per_row = LANE * (8 * 4 + C * pred_cls.dtype.itemsize
                            + jnp.dtype(label_dtype).itemsize)
    vmem_budget = 12 * 1024 * 1024                 # double-buffered input budget
    max_rows = max(8, int(vmem_budget // (2 * bytes_per_row) // 8) * 8)

    tile_rows = min(tile_rows, n_rows_min, max_rows)
    tile_rows = max(8, (tile_rows // 8) * 8)       # (8,128) BlockSpec constraint
    # Keep >= 2 tiles when possible so v7x's two TensorCores both get work.
    if n_rows_min >= 16 and pl.cdiv(n_rows_min, tile_rows) < 2:
        tile_rows = max(8, (pl.cdiv(n_rows_min, 2) // 8) * 8)
    num_tiles = pl.cdiv(n_rows_min, tile_rows)
    n_rows = num_tiles * tile_rows
    pad = n_rows * LANE - P

    # Lane-dense f32 box planes: (8, n_rows, 128); prior p -> (:, p//128, p%128).
    # (Optionally bf16 on v5e to halve the dominant input; kept f32 here to
    #  preserve the reference precision.)
    # TODO(synk): ideally the upstream head emits plane-major directly; this
    # concat/transpose is one extra (fused-or-small) HBM pass outside the kernel.
    planes = jnp.concatenate(
        [pred_locs.reshape(P, 4).astype(jnp.float32),
         true_locs.reshape(P, 4).astype(jnp.float32)], axis=1)        # (P, 8)
    boxes = jnp.pad(planes, ((0, pad), (0, 0))).T.reshape(8, n_rows, LANE)

    # Lane-dense labels (padding = 0 -> background), narrow dtype on the DMA path.
    labels = jnp.pad(true_classes.reshape(P), ((0, pad),))
    labels = labels.astype(label_dtype).reshape(n_rows, LANE)

    # Class-plane-major logits (C, n_rows, 128) in the network's native dtype
    # (bf16 in the demo); upcast per plane inside the kernel.
    logits = jnp.transpose(pred_cls.reshape(P, C), (1, 0))            # (C, P)
    logits = jnp.pad(logits, ((0, 0), (0, pad))).reshape(C, n_rows, LANE)

    kernel = _make_box_loss_kernel(P, tile_rows, C)
    partials = pl.pallas_call(
        kernel,
        out_shape=jax.ShapeDtypeStruct((num_tiles, 8, LANE), jnp.float32),
        grid=(num_tiles,),
        in_specs=[
            pl.BlockSpec((8, tile_rows, LANE), lambda i: (0, i, 0)),
            pl.BlockSpec((tile_rows, LANE), lambda i: (i, 0)),
            pl.BlockSpec((C, tile_rows, LANE), lambda i: (0, i, 0)),
        ],
        out_specs=pl.BlockSpec((1, 8, LANE), lambda i: (i, 0, 0)),
        compiler_params=pltpu.CompilerParams(
            dimension_semantics=("parallel",),
            vmem_limit_bytes=32 * 1024 * 1024),
    )(boxes, labels, logits)

    totals = jnp.sum(partials[:, :4, :], axis=(0, 2))                 # (4,)
    l1_sum, iou_sum, n_pos, ce_sum = totals[0], totals[1], totals[2], totals[3]
    # Guard against batches with zero positive priors (PyTorch would NaN here).
    n_pos_safe = jnp.maximum(n_pos, 1.0)
    loc_loss = l1_sum / (4.0 * n_pos_safe)
    iou_loss = iou_sum / n_pos_safe
    cross_loss = ce_sum / float(P)
    return loc_loss, cross_loss, iou_loss


# ----------------------------------------------------------------------------
# Plain-JAX glue: prior <-> target matching (stand-in for
# Calculate_bbox_target_classes) and the xywh -> xyxy conversion from forward().
# ----------------------------------------------------------------------------
def match_priors(prior_bboxes, target_xyxy, target_labels,
                 threshold=THRESHOLD, eps=EPS):
    # prior_bboxes: (n_priors, 4) cxcywh; target_xyxy: (n_obj, 4); labels: (n_obj,)
    prior_xyxy = jnp.concatenate(
        [prior_bboxes[:, :2] - prior_bboxes[:, 2:] / 2,
         prior_bboxes[:, :2] + prior_bboxes[:, 2:] / 2], axis=-1)
    lo = jnp.maximum(prior_xyxy[:, None, :2], target_xyxy[None, :, :2])
    hi = jnp.minimum(prior_xyxy[:, None, 2:], target_xyxy[None, :, 2:])
    wh = jnp.clip(hi - lo, 0.0)
    inter = wh[..., 0] * wh[..., 1]
    area_p = ((prior_xyxy[:, 2] - prior_xyxy[:, 0]) *
              (prior_xyxy[:, 3] - prior_xyxy[:, 1]))
    area_t = ((target_xyxy[:, 2] - target_xyxy[:, 0]) *
              (target_xyxy[:, 3] - target_xyxy[:, 1]))
    iou = inter / (area_p[:, None] + area_t[None, :] - inter + eps)
    best_t = jnp.argmax(iou, axis=1)
    best_iou = jnp.max(iou, axis=1)
    classes = jnp.where(best_iou > threshold, target_labels[best_t], 0)
    matched = target_xyxy[best_t]
    matched_cxcywh = jnp.concatenate(
        [(matched[:, :2] + matched[:, 2:]) / 2,
         matched[:, 2:] - matched[:, :2]], axis=-1)
    return classes.astype(jnp.int32), matched_cxcywh.astype(jnp.float32)


def box_loss_forward(prior_bboxes, predictlocs, predictcls,
                     target_bboxes, target_labels):
    # target_bboxes come in as (x, y, w, h) -> convert to (x1, y1, x2, y2)
    tb_xyxy = jnp.concatenate(
        [target_bboxes[..., :2], target_bboxes[..., :2] + target_bboxes[..., 2:]],
        axis=-1)
    true_classes, true_locs = jax.vmap(
        lambda b, l: match_priors(prior_bboxes, b, l))(tb_xyxy, target_labels)
    loc_loss, cross_loss, iou_loss = box_losses_pallas(
        predictlocs, predictcls, true_locs, true_classes)
    return loc_loss, cross_loss, iou_loss


# ----------------------------------------------------------------------------
# Demo
# ----------------------------------------------------------------------------
if __name__ == "__main__":
    key = jax.random.PRNGKey(0)
    B, N_PRIORS, N_CLASSES, N_OBJ = 2, 8192, 8, 4

    k1, k2, k3, k4, k5, k6 = jax.random.split(key, 6)

    # Ground-truth boxes in (x, y, w, h), coordinates in [0, 1].
    t_xy = jax.random.uniform(k1, (B, N_OBJ, 2), minval=0.05, maxval=0.55)
    t_wh = jax.random.uniform(k2, (B, N_OBJ, 2), minval=0.15, maxval=0.35)
    target_bboxes = jnp.concatenate([t_xy, t_wh], axis=-1)
    target_labels = jax.random.randint(k3, (B, N_OBJ), 1, N_CLASSES)

    # Prior boxes in (cx, cy, w, h).  Seed the first B*N_OBJ priors with the
    # ground-truth boxes so that positive matches are guaranteed.
    p_cxy = jax.random.uniform(k4, (N_PRIORS, 2), minval=0.1, maxval=0.9)
    p_wh = jax.random.uniform(k5, (N_PRIORS, 2), minval=0.1, maxval=0.4)
    prior_bboxes = jnp.concatenate([p_cxy, p_wh], axis=-1)
    gt_cxcywh = jnp.concatenate([t_xy + t_wh / 2, t_wh], axis=-1).reshape(-1, 4)
    prior_bboxes = prior_bboxes.at[: B * N_OBJ].set(gt_cxcywh)

    # Network predictions (logits in bf16: the kernel reads the native dtype
    # and upcasts per class plane, halving HBM traffic on that input).
    predictlocs = prior_bboxes[None] + 0.02 * jax.random.normal(
        k6, (B, N_PRIORS, 4))
    predictcls = jax.random.normal(
        jax.random.fold_in(key, 7), (B, N_PRIORS, N_CLASSES)).astype(jnp.bfloat16)

    loc_loss, cross_loss, iou_loss = jax.jit(box_loss_forward)(
        prior_bboxes, predictlocs, predictcls, target_bboxes, target_labels)
    jax.block_until_ready((loc_loss, cross_loss, iou_loss))

    assert jnp.isfinite(loc_loss) and jnp.isfinite(cross_loss) and jnp.isfinite(iou_loss)
    print("KERNEL_OK")
</pallas_src>

<mosaic_0001>
module attributes {stable_mosaic.version = 11 : i64} {
  func.func @kernel(%arg0: i32, %arg1: memref<8x64x128xf32, #tpu.memory_space<vmem>>, %arg2: memref<64x128xi8, #tpu.memory_space<vmem>>, %arg3: memref<8x64x128xbf16, #tpu.memory_space<vmem>>, %arg4: memref<1x8x128xf32, #tpu.memory_space<vmem>>) attributes {dimension_semantics = [#tpu.dimension_semantics<parallel>], iteration_bounds = array<i64: 2>, scalar_prefetch = 0 : i64, scratch_operands = 0 : i64, tpu.core_type = #tpu.core_type<tc>, window_params = [{transform_indices = @transform_0, window_bounds = array<i64: 8, 64, 128>}, {transform_indices = @transform_1, window_bounds = array<i64: 64, 128>}, {transform_indices = @transform_2, window_bounds = array<i64: 8, 64, 128>}, {transform_indices = @transform_3, window_bounds = array<i64: 1, 8, 128>}]} {
    %c0 = arith.constant 0 : index
    %c0_0 = arith.constant 0 : index
    %c0_1 = arith.constant 0 : index
    %0 = vector.load %arg1[%c0, %c0_0, %c0_1] : memref<8x64x128xf32, #tpu.memory_space<vmem>>, vector<1x64x128xf32>
    %1 = vector.shape_cast %0 : vector<1x64x128xf32> to vector<64x128xf32>
    %c1 = arith.constant 1 : index
    %c0_2 = arith.constant 0 : index
    %c0_3 = arith.constant 0 : index
    %2 = vector.load %arg1[%c1, %c0_2, %c0_3] : memref<8x64x128xf32, #tpu.memory_space<vmem>>, vector<1x64x128xf32>
    %3 = vector.shape_cast %2 : vector<1x64x128xf32> to vector<64x128xf32>
    %c2 = arith.constant 2 : index
    %c0_4 = arith.constant 0 : index
    %c0_5 = arith.constant 0 : index
    %4 = vector.load %arg1[%c2, %c0_4, %c0_5] : memref<8x64x128xf32, #tpu.memory_space<vmem>>, vector<1x64x128xf32>
    %5 = vector.shape_cast %4 : vector<1x64x128xf32> to vector<64x128xf32>
    %c3 = arith.constant 3 : index
    %c0_6 = arith.constant 0 : index
    %c0_7 = arith.constant 0 : index
    %6 = vector.load %arg1[%c3, %c0_6, %c0_7] : memref<8x64x128xf32, #tpu.memory_space<vmem>>, vector<1x64x128xf32>
    %7 = vector.shape_cast %6 : vector<1x64x128xf32> to vector<64x128xf32>
    %c4 = arith.constant 4 : index
    %c0_8 = arith.constant 0 : index
    %c0_9 = arith.constant 0 : index
    %8 = vector.load %arg1[%c4, %c0_8, %c0_9] : memref<8x64x128xf32, #tpu.memory_space<vmem>>, vector<1x64x128xf32>
    %9 = vector.shape_cast %8 : vector<1x64x128xf32> to vector<64x128xf32>
    %c5 = arith.constant 5 : index
    %c0_10 = arith.constant 0 : index
    %c0_11 = arith.constant 0 : index
    %10 = vector.load %arg1[%c5, %c0_10, %c0_11] : memref<8x64x128xf32, #tpu.memory_space<vmem>>, vector<1x64x128xf32>
    %11 = vector.shape_cast %10 : vector<1x64x128xf32> to vector<64x128xf32>
    %c6 = arith.constant 6 : index
    %c0_12 = arith.constant 0 : index
    %c0_13 = arith.constant 0 : index
    %12 = vector.load %arg1[%c6, %c0_12, %c0_13] : memref<8x64x128xf32, #tpu.memory_space<vmem>>, vector<1x64x128xf32>
    %13 = vector.shape_cast %12 : vector<1x64x128xf32> to vector<64x128xf32>
    %c7 = arith.constant 7 : index
    %c0_14 = arith.constant 0 : index
    %c0_15 = arith.constant 0 : index
    %14 = vector.load %arg1[%c7, %c0_14, %c0_15] : memref<8x64x128xf32, #tpu.memory_space<vmem>>, vector<1x64x128xf32>
    %15 = vector.shape_cast %14 : vector<1x64x128xf32> to vector<64x128xf32>
    %c0_16 = arith.constant 0 : index
    %c0_17 = arith.constant 0 : index
    %16 = vector.load %arg2[%c0_16, %c0_17] : memref<64x128xi8, #tpu.memory_space<vmem>>, vector<64x128xi8>
    %17 = arith.extsi %16 : vector<64x128xi8> to vector<64x128xi32>
    %c0_i32 = arith.constant 0 : i32
    %18 = vector.broadcast %c0_i32 : i32 to vector<64x128xi32>
    %19 = arith.cmpi ne, %17, %18 : vector<64x128xi32>
    %20 = arith.extui %19 : vector<64x128xi1> to vector<64x128xi32>
    %21 = arith.sitofp %20 : vector<64x128xi32> to vector<64x128xf32>
    %22 = arith.subf %1, %9 : vector<64x128xf32>
    %23 = math.absf %22 : vector<64x128xf32>
    %24 = arith.subf %3, %11 : vector<64x128xf32>
    %25 = math.absf %24 : vector<64x128xf32>
    %26 = arith.addf %23, %25 : vector<64x128xf32>
    %27 = arith.subf %5, %13 : vector<64x128xf32>
    %28 = math.absf %27 : vector<64x128xf32>
    %29 = arith.addf %26, %28 : vector<64x128xf32>
    %30 = arith.subf %7, %15 : vector<64x128xf32>
    %31 = math.absf %30 : vector<64x128xf32>
    %32 = arith.addf %29, %31 : vector<64x128xf32>
    %cst = arith.constant 5.000000e-01 : f32
    %33 = vector.broadcast %cst : f32 to vector<64x128xf32>
    %34 = arith.mulf %33, %5 : vector<64x128xf32>
    %35 = arith.subf %1, %34 : vector<64x128xf32>
    %cst_18 = arith.constant 5.000000e-01 : f32
    %36 = vector.broadcast %cst_18 : f32 to vector<64x128xf32>
    %37 = arith.mulf %36, %5 : vector<64x128xf32>
    %38 = arith.addf %1, %37 : vector<64x128xf32>
    %cst_19 = arith.constant 5.000000e-01 : f32
    %39 = vector.broadcast %cst_19 : f32 to vector<64x128xf32>
    %40 = arith.mulf %39, %7 : vector<64x128xf32>
    %41 = arith.subf %3, %40 : vector<64x128xf32>
    %cst_20 = arith.constant 5.000000e-01 : f32
    %42 = vector.broadcast %cst_20 : f32 to vector<64x128xf32>
    %43 = arith.mulf %42, %7 : vector<64x128xf32>
    %44 = arith.addf %3, %43 : vector<64x128xf32>
    %cst_21 = arith.constant 5.000000e-01 : f32
    %45 = vector.broadcast %cst_21 : f32 to vector<64x128xf32>
    %46 = arith.mulf %45, %13 : vector<64x128xf32>
    %47 = arith.subf %9, %46 : vector<64x128xf32>
    %cst_22 = arith.constant 5.000000e-01 : f32
    %48 = vector.broadcast %cst_22 : f32 to vector<64x128xf32>
    %49 = arith.mulf %48, %13 : vector<64x128xf32>
    %50 = arith.addf %9, %49 : vector<64x128xf32>
    %cst_23 = arith.constant 5.000000e-01 : f32
    %51 = vector.broadcast %cst_23 : f32 to vector<64x128xf32>
    %52 = arith.mulf %51, %15 : vector<64x128xf32>
    %53 = arith.subf %11, %52 : vector<64x128xf32>
    %cst_24 = arith.constant 5.000000e-01 : f32
    %54 = vector.broadcast %cst_24 : f32 to vector<64x128xf32>
    %55 = arith.mulf %54, %15 : vector<64x128xf32>
    %56 = arith.addf %11, %55 : vector<64x128xf32>
    %57 = arith.minimumf %38, %50 : vector<64x128xf32>
    %58 = arith.maximumf %35, %47 : vector<64x128xf32>
    %59 = arith.subf %57, %58 : vector<64x128xf32>
    %cst_25 = arith.constant 0.000000e+00 : f32
    %60 = vector.broadcast %cst_25 : f32 to vector<64x128xf32>
    %61 = arith.maximumf %59, %60 : vector<64x128xf32>
    %62 = arith.minimumf %44, %56 : vector<64x128xf32>
    %63 = arith.maximumf %41, %53 : vector<64x128xf32>
    %64 = arith.subf %62, %63 : vector<64x128xf32>
    %cst_26 = arith.constant 0.000000e+00 : f32
    %65 = vector.broadcast %cst_26 : f32 to vector<64x128xf32>
    %66 = arith.maximumf %64, %65 : vector<64x128xf32>
    %67 = arith.mulf %61, %66 : vector<64x128xf32>
    %68 = arith.mulf %5, %7 : vector<64x128xf32>
    %69 = arith.mulf %13, %15 : vector<64x128xf32>
    %70 = arith.addf %68, %69 : vector<64x128xf32>
    %71 = arith.subf %70, %67 : vector<64x128xf32>
    %cst_27 = arith.constant 9.99999997E-7 : f32
    %72 = vector.broadcast %cst_27 : f32 to vector<64x128xf32>
    %73 = arith.addf %71, %72 : vector<64x128xf32>
    %74 = arith.divf %67, %73 : vector<64x128xf32>
    %cst_28 = arith.constant 1.000000e+00 : f32
    %75 = vector.broadcast %cst_28 : f32 to vector<64x128xf32>
    %76 = arith.subf %75, %74 : vector<64x128xf32>
    %c0_29 = arith.constant 0 : index
    %c0_30 = arith.constant 0 : index
    %c0_31 = arith.constant 0 : index
    %77 = vector.load %arg3[%c0_29, %c0_30, %c0_31] : memref<8x64x128xbf16, #tpu.memory_space<vmem>>, vector<1x64x128xbf16>
    %78 = vector.shape_cast %77 : vector<1x64x128xbf16> to vector<64x128xbf16>
    %79 = arith.extf %78 : vector<64x128xbf16> to vector<64x128xf32>
    %c1_32 = arith.constant 1 : index
    %c0_33 = arith.constant 0 : index
    %c0_34 = arith.constant 0 : index
    %80 = vector.load %arg3[%c1_32, %c0_33, %c0_34] : memref<8x64x128xbf16, #tpu.memory_space<vmem>>, vector<1x64x128xbf16>
    %81 = vector.shape_cast %80 : vector<1x64x128xbf16> to vector<64x128xbf16>
    %82 = arith.extf %81 : vector<64x128xbf16> to vector<64x128xf32>
    %83 = arith.maximumf %79, %82 : vector<64x128xf32>
    %c2_35 = arith.constant 2 : index
    %c0_36 = arith.constant 0 : index
    %c0_37 = arith.constant 0 : index
    %84 = vector.load %arg3[%c2_35, %c0_36, %c0_37] : memref<8x64x128xbf16, #tpu.memory_space<vmem>>, vector<1x64x128xbf16>
    %85 = vector.shape_cast %84 : vector<1x64x128xbf16> to vector<64x128xbf16>
    %86 = arith.extf %85 : vector<64x128xbf16> to vector<64x128xf32>
    %87 = arith.maximumf %83, %86 : vector<64x128xf32>
    %c3_38 = arith.constant 3 : index
    %c0_39 = arith.constant 0 : index
    %c0_40 = arith.constant 0 : index
    %88 = vector.load %arg3[%c3_38, %c0_39, %c0_40] : memref<8x64x128xbf16, #tpu.memory_space<vmem>>, vector<1x64x128xbf16>
    %89 = vector.shape_cast %88 : vector<1x64x128xbf16> to vector<64x128xbf16>
    %90 = arith.extf %89 : vector<64x128xbf16> to vector<64x128xf32>
    %91 = arith.maximumf %87, %90 : vector<64x128xf32>
    %c4_41 = arith.constant 4 : index
    %c0_42 = arith.constant 0 : index
    %c0_43 = arith.constant 0 : index
    %92 = vector.load %arg3[%c4_41, %c0_42, %c0_43] : memref<8x64x128xbf16, #tpu.memory_space<vmem>>, vector<1x64x128xbf16>
    %93 = vector.shape_cast %92 : vector<1x64x128xbf16> to vector<64x128xbf16>
    %94 = arith.extf %93 : vector<64x128xbf16> to vector<64x128xf32>
    %95 = arith.maximumf %91, %94 : vector<64x128xf32>
    %c5_44 = arith.constant 5 : index
    %c0_45 = arith.constant 0 : index
    %c0_46 = arith.constant 0 : index
    %96 = vector.load %arg3[%c5_44, %c0_45, %c0_46] : memref<8x64x128xbf16, #tpu.memory_space<vmem>>, vector<1x64x128xbf16>
    %97 = vector.shape_cast %96 : vector<1x64x128xbf16> to vector<64x128xbf16>
    %98 = arith.extf %97 : vector<64x128xbf16> to vector<64x128xf32>
    %99 = arith.maximumf %95, %98 : vector<64x128xf32>
    %c6_47 = arith.constant 6 : index
    %c0_48 = arith.constant 0 : index
    %c0_49 = arith.constant 0 : index
    %100 = vector.load %arg3[%c6_47, %c0_48, %c0_49] : memref<8x64x128xbf16, #tpu.memory_space<vmem>>, vector<1x64x128xbf16>
    %101 = vector.shape_cast %100 : vector<1x64x128xbf16> to vector<64x128xbf16>
    %102 = arith.extf %101 : vector<64x128xbf16> to vector<64x128xf32>
    %103 = arith.maximumf %99, %102 : vector<64x128xf32>
    %c7_50 = arith.constant 7 : index
    %c0_51 = arith.constant 0 : index
    %c0_52 = arith.constant 0 : index
    %104 = vector.load %arg3[%c7_50, %c0_51, %c0_52] : memref<8x64x128xbf16, #tpu.memory_space<vmem>>, vector<1x64x128xbf16>
    %105 = vector.shape_cast %104 : vector<1x64x128xbf16> to vector<64x128xbf16>
    %106 = arith.extf %105 : vector<64x128xbf16> to vector<64x128xf32>
    %107 = arith.maximumf %103, %106 : vector<64x128xf32>
    %cst_53 = arith.constant 0.000000e+00 : f32
    %108 = vector.broadcast %cst_53 : f32 to vector<64x128xf32>
    %cst_54 = arith.constant 0.000000e+00 : f32
    %109 = vector.broadcast %cst_54 : f32 to vector<64x128xf32>
    %c0_55 = arith.constant 0 : index
    %c0_56 = arith.constant 0 : index
    %c0_57 = arith.constant 0 : index
    %110 = vector.load %arg3[%c0_55, %c0_56, %c0_57] : memref<8x64x128xbf16, #tpu.memory_space<vmem>>, vector<1x64x128xbf16>
    %111 = vector.shape_cast %110 : vector<1x64x128xbf16> to vector<64x128xbf16>
    %112 = arith.extf %111 : vector<64x128xbf16> to vector<64x128xf32>
    %113 = arith.subf %112, %107 : vector<64x128xf32>
    %114 = math.exp %113 : vector<64x128xf32>
    %115 = arith.addf %108, %114 : vector<64x128xf32>
    %c0_i32_58 = arith.constant 0 : i32
    %116 = vector.broadcast %c0_i32_58 : i32 to vector<64x128xi32>
    %117 = arith.cmpi eq, %17, %116 : vector<64x128xi32>
    %118 = arith.select %117, %112, %109 : vector<64x128xi1>, vector<64x128xf32>
    %c1_59 = arith.constant 1 : index
    %c0_60 = arith.constant 0 : index
    %c0_61 = arith.constant 0 : index
    %119 = vector.load %arg3[%c1_59, %c0_60, %c0_61] : memref<8x64x128xbf16, #tpu.memory_space<vmem>>, vector<1x64x128xbf16>
    %120 = vector.shape_cast %119 : vector<1x64x128xbf16> to vector<64x128xbf16>
    %121 = arith.extf %120 : vector<64x128xbf16> to vector<64x128xf32>
    %122 = arith.subf %121, %107 : vector<64x128xf32>
    %123 = math.exp %122 : vector<64x128xf32>
    %124 = arith.addf %115, %123 : vector<64x128xf32>
    %c1_i32 = arith.constant 1 : i32
    %125 = vector.broadcast %c1_i32 : i32 to vector<64x128xi32>
    %126 = arith.cmpi eq, %17, %125 : vector<64x128xi32>
    %127 = arith.select %126, %121, %118 : vector<64x128xi1>, vector<64x128xf32>
    %c2_62 = arith.constant 2 : index
    %c0_63 = arith.constant 0 : index
    %c0_64 = arith.constant 0 : index
    %128 = vector.load %arg3[%c2_62, %c0_63, %c0_64] : memref<8x64x128xbf16, #tpu.memory_space<vmem>>, vector<1x64x128xbf16>
    %129 = vector.shape_cast %128 : vector<1x64x128xbf16> to vector<64x128xbf16>
    %130 = arith.extf %129 : vector<64x128xbf16> to vector<64x128xf32>
    %131 = arith.subf %130, %107 : vector<64x128xf32>
    %132 = math.exp %131 : vector<64x128xf32>
    %133 = arith.addf %124, %132 : vector<64x128xf32>
    %c2_i32 = arith.constant 2 : i32
    %134 = vector.broadcast %c2_i32 : i32 to vector<64x128xi32>
    %135 = arith.cmpi eq, %17, %134 : vector<64x128xi32>
    %136 = arith.select %135, %130, %127 : vector<64x128xi1>, vector<64x128xf32>
    %c3_65 = arith.constant 3 : index
    %c0_66 = arith.constant 0 : index
    %c0_67 = arith.constant 0 : index
    %137 = vector.load %arg3[%c3_65, %c0_66, %c0_67] : memref<8x64x128xbf16, #tpu.memory_space<vmem>>, vector<1x64x128xbf16>
    %138 = vector.shape_cast %137 : vector<1x64x128xbf16> to vector<64x128xbf16>
    %139 = arith.extf %138 : vector<64x128xbf16> to vector<64x128xf32>
    %140 = arith.subf %139, %107 : vector<64x128xf32>
    %141 = math.exp %140 : vector<64x128xf32>
    %142 = arith.addf %133, %141 : vector<64x128xf32>
    %c3_i32 = arith.constant 3 : i32
    %143 = vector.broadcast %c3_i32 : i32 to vector<64x128xi32>
    %144 = arith.cmpi eq, %17, %143 : vector<64x128xi32>
    %145 = arith.select %144, %139, %136 : vector<64x128xi1>, vector<64x128xf32>
    %c4_68 = arith.constant 4 : index
    %c0_69 = arith.constant 0 : index
    %c0_70 = arith.constant 0 : index
    %146 = vector.load %arg3[%c4_68, %c0_69, %c0_70] : memref<8x64x128xbf16, #tpu.memory_space<vmem>>, vector<1x64x128xbf16>
    %147 = vector.shape_cast %146 : vector<1x64x128xbf16> to vector<64x128xbf16>
    %148 = arith.extf %147 : vector<64x128xbf16> to vector<64x128xf32>
    %149 = arith.subf %148, %107 : vector<64x128xf32>
    %150 = math.exp %149 : vector<64x128xf32>
    %151 = arith.addf %142, %150 : vector<64x128xf32>
    %c4_i32 = arith.constant 4 : i32
    %152 = vector.broadcast %c4_i32 : i32 to vector<64x128xi32>
    %153 = arith.cmpi eq, %17, %152 : vector<64x128xi32>
    %154 = arith.select %153, %148, %145 : vector<64x128xi1>, vector<64x128xf32>
    %c5_71 = arith.constant 5 : index
    %c0_72 = arith.constant 0 : index
    %c0_73 = arith.constant 0 : index
    %155 = vector.load %arg3[%c5_71, %c0_72, %c0_73] : memref<8x64x128xbf16, #tpu.memory_space<vmem>>, vector<1x64x128xbf16>
    %156 = vector.shape_cast %155 : vector<1x64x128xbf16> to vector<64x128xbf16>
    %157 = arith.extf %156 : vector<64x128xbf16> to vector<64x128xf32>
    %158 = arith.subf %157, %107 : vector<64x128xf32>
    %159 = math.exp %158 : vector<64x128xf32>
    %160 = arith.addf %151, %159 : vector<64x128xf32>
    %c5_i32 = arith.constant 5 : i32
    %161 = vector.broadcast %c5_i32 : i32 to vector<64x128xi32>
    %162 = arith.cmpi eq, %17, %161 : vector<64x128xi32>
    %163 = arith.select %162, %157, %154 : vector<64x128xi1>, vector<64x128xf32>
    %c6_74 = arith.constant 6 : index
    %c0_75 = arith.constant 0 : index
    %c0_76 = arith.constant 0 : index
    %164 = vector.load %arg3[%c6_74, %c0_75, %c0_76] : memref<8x64x128xbf16, #tpu.memory_space<vmem>>, vector<1x64x128xbf16>
    %165 = vector.shape_cast %164 : vector<1x64x128xbf16> to vector<64x128xbf16>
    %166 = arith.extf %165 : vector<64x128xbf16> to vector<64x128xf32>
    %167 = arith.subf %166, %107 : vector<64x128xf32>
    %168 = math.exp %167 : vector<64x128xf32>
    %169 = arith.addf %160, %168 : vector<64x128xf32>
    %c6_i32 = arith.constant 6 : i32
    %170 = vector.broadcast %c6_i32 : i32 to vector<64x128xi32>
    %171 = arith.cmpi eq, %17, %170 : vector<64x128xi32>
    %172 = arith.select %171, %166, %163 : vector<64x128xi1>, vector<64x128xf32>
    %c7_77 = arith.constant 7 : index
    %c0_78 = arith.constant 0 : index
    %c0_79 = arith.constant 0 : index
    %173 = vector.load %arg3[%c7_77, %c0_78, %c0_79] : memref<8x64x128xbf16, #tpu.memory_space<vmem>>, vector<1x64x128xbf16>
    %174 = vector.shape_cast %173 : vector<1x64x128xbf16> to vector<64x128xbf16>
    %175 = arith.extf %174 : vector<64x128xbf16> to vector<64x128xf32>
    %176 = arith.subf %175, %107 : vector<64x128xf32>
    %177 = math.exp %176 : vector<64x128xf32>
    %178 = arith.addf %169, %177 : vector<64x128xf32>
    %c7_i32 = arith.constant 7 : i32
    %179 = vector.broadcast %c7_i32 : i32 to vector<64x128xi32>
    %180 = arith.cmpi eq, %17, %179 : vector<64x128xi32>
    %181 = arith.select %180, %175, %172 : vector<64x128xi1>, vector<64x128xf32>
    %182 = math.log %178 : vector<64x128xf32>
    %183 = arith.addf %182, %107 : vector<64x128xf32>
    %184 = arith.subf %183, %181 : vector<64x128xf32>
    %185 = arith.mulf %32, %21 : vector<64x128xf32>
    %cst_80 = arith.constant dense<0.000000e+00> : vector<128xf32>
    %186 = vector.multi_reduction <add>, %185, %cst_80 [0] : vector<64x128xf32> to vector<128xf32>
    %187 = vector.shape_cast %186 : vector<128xf32> to vector<1x128xf32>
    %c0_81 = arith.constant 0 : index
    %c0_82 = arith.constant 0 : index
    %c0_83 = arith.constant 0 : index
    %188 = vector.load %arg4[%c0_81, %c0_82, %c0_83] : memref<1x8x128xf32, #tpu.memory_space<vmem>>, vector<1x1x128xf32>
    %189 = vector.shape_cast %188 : vector<1x1x128xf32> to vector<1x128xf32>
    %190 = vector.shape_cast %187 : vector<1x128xf32> to vector<1x1x128xf32>
    tpu.vector_store %arg4[%c0_81, %c0_82, %c0_83], %190 {strides = array<i32>} : memref<1x8x128xf32, #tpu.memory_space<vmem>>, vector<1x1x128xf32>,
    %191 = arith.mulf %76, %21 : vector<64x128xf32>
    %cst_84 = arith.constant dense<0.000000e+00> : vector<128xf32>
    %192 = vector.multi_reduction <add>, %191, %cst_84 [0] : vector<64x128xf32> to vector<128xf32>
    %193 = vector.shape_cast %192 : vector<128xf32> to vector<1x128xf32>
    %c0_85 = arith.constant 0 : index
    %c1_86 = arith.constant 1 : index
    %c0_87 = arith.constant 0 : index
    %194 = vector.load %arg4[%c0_85, %c1_86, %c0_87] : memref<1x8x128xf32, #tpu.memory_space<vmem>>, vector<1x1x128xf32>
    %195 = vector.shape_cast %194 : vector<1x1x128xf32> to vector<1x128xf32>
    %196 = vector.shape_cast %193 : vector<1x128xf32> to vector<1x1x128xf32>
    tpu.vector_store %arg4[%c0_85, %c1_86, %c0_87], %196 {strides = array<i32>} : memref<1x8x128xf32, #tpu.memory_space<vmem>>, vector<1x1x128xf32>,
    %cst_88 = arith.constant dense<0.000000e+00> : vector<128xf32>
    %197 = vector.multi_reduction <add>, %21, %cst_88 [0] : vector<64x128xf32> to vector<128xf32>
    %198 = vector.shape_cast %197 : vector<128xf32> to vector<1x128xf32>
    %c0_89 = arith.constant 0 : index
    %c2_90 = arith.constant 2 : index
    %c0_91 = arith.constant 0 : index
    %199 = vector.load %arg4[%c0_89, %c2_90, %c0_91] : memref<1x8x128xf32, #tpu.memory_space<vmem>>, vector<1x1x128xf32>
    %200 = vector.shape_cast %199 : vector<1x1x128xf32> to vector<1x128xf32>
    %201 = vector.shape_cast %198 : vector<1x128xf32> to vector<1x1x128xf32>
    tpu.vector_store %arg4[%c0_89, %c2_90, %c0_91], %201 {strides = array<i32>} : memref<1x8x128xf32, #tpu.memory_space<vmem>>, vector<1x1x128xf32>,
    %cst_92 = arith.constant dense<0.000000e+00> : vector<128xf32>
    %202 = vector.multi_reduction <add>, %184, %cst_92 [0] : vector<64x128xf32> to vector<128xf32>
    %203 = vector.shape_cast %202 : vector<128xf32> to vector<1x128xf32>
    %c0_93 = arith.constant 0 : index
    %c3_94 = arith.constant 3 : index
    %c0_95 = arith.constant 0 : index
    %204 = vector.load %arg4[%c0_93, %c3_94, %c0_95] : memref<1x8x128xf32, #tpu.memory_space<vmem>>, vector<1x1x128xf32>
    %205 = vector.shape_cast %204 : vector<1x1x128xf32> to vector<1x128xf32>
    %206 = vector.shape_cast %203 : vector<1x128xf32> to vector<1x1x128xf32>
    tpu.vector_store %arg4[%c0_93, %c3_94, %c0_95], %206 {strides = array<i32>} : memref<1x8x128xf32, #tpu.memory_space<vmem>>, vector<1x1x128xf32>,
    %cst_96 = arith.constant 0.000000e+00 : f32
    %207 = vector.broadcast %cst_96 : f32 to vector<4x128xf32>
    %c0_97 = arith.constant 0 : index
    %c4_98 = arith.constant 4 : index
    %c0_99 = arith.constant 0 : index
    %208 = vector.load %arg4[%c0_97, %c4_98, %c0_99] : memref<1x8x128xf32, #tpu.memory_space<vmem>>, vector<1x4x128xf32>
    %209 = vector.shape_cast %208 : vector<1x4x128xf32> to vector<4x128xf32>
    %210 = vector.shape_cast %207 : vector<4x128xf32> to vector<1x4x128xf32>
    tpu.vector_store %arg4[%c0_97, %c4_98, %c0_99], %210 {strides = array<i32>} : memref<1x8x128xf32, #tpu.memory_space<vmem>>, vector<1x4x128xf32>,
    %c1_i32_100 = arith.constant 1 : i32
    %211 = arith.cmpi eq, %arg0, %c1_i32_100 : i32
    %212 = arith.extui %211 : i1 to i32
    %c0_i32_101 = arith.constant 0 : i32
    %213 = arith.cmpi ne, %212, %c0_i32_101 : i32
    scf.if %213 {
      %214 = tpu.iota {dimensions = array<i32: 0>} : vector<64x128xi32>
      %215 = tpu.iota {dimensions = array<i32: 1>} : vector<64x128xi32>
      %c64_i32 = arith.constant 64 : i32
      %216 = arith.muli %arg0, %c64_i32 : i32
      %217 = vector.broadcast %216 : i32 to vector<64x128xi32>
      %218 = arith.addi %217, %214 : vector<64x128xi32>
      %c128_i32 = arith.constant 128 : i32
      %219 = vector.broadcast %c128_i32 : i32 to vector<64x128xi32>
      %220 = arith.muli %218, %219 : vector<64x128xi32>
      %221 = arith.addi %220, %215 : vector<64x128xi32>
      %c16384_i32 = arith.constant 16384 : i32
      %222 = vector.broadcast %c16384_i32 : i32 to vector<64x128xi32>
      %223 = arith.cmpi slt, %221, %222 : vector<64x128xi32>
      %224 = arith.extui %223 : vector<64x128xi1> to vector<64x128xi32>
      %225 = arith.sitofp %224 : vector<64x128xi32> to vector<64x128xf32>
      %226 = arith.mulf %184, %225 : vector<64x128xf32>
      %cst_102 = arith.constant dense<0.000000e+00> : vector<128xf32>
      %227 = vector.multi_reduction <add>, %226, %cst_102 [0] : vector<64x128xf32> to vector<128xf32>
      %228 = vector.shape_cast %227 : vector<128xf32> to vector<1x128xf32>
      %c0_103 = arith.constant 0 : index
      %c3_104 = arith.constant 3 : index
      %c0_105 = arith.constant 0 : index
      %229 = vector.load %arg4[%c0_103, %c3_104, %c0_105] : memref<1x8x128xf32, #tpu.memory_space<vmem>>, vector<1x1x128xf32>
      %230 = vector.shape_cast %229 : vector<1x1x128xf32> to vector<1x128xf32>
      %231 = vector.shape_cast %228 : vector<1x128xf32> to vector<1x1x128xf32>
      tpu.vector_store %arg4[%c0_103, %c3_104, %c0_105], %231 {strides = array<i32>} : memref<1x8x128xf32, #tpu.memory_space<vmem>>, vector<1x1x128xf32>,
    } else {
    }
    return
  }
  func.func @transform_0(%arg0: i32) -> (i32, i32, i32) {
    %c0_i32 = arith.constant 0 : i32
    %c0_i32_0 = arith.constant 0 : i32
    %c0_i32_1 = arith.constant 0 : i32
    return %c0_i32, %arg0, %c0_i32_0 : i32, i32, i32
  }
  func.func @transform_1(%arg0: i32) -> (i32, i32) {
    %c0_i32 = arith.constant 0 : i32
    %c0_i32_0 = arith.constant 0 : i32
    return %arg0, %c0_i32 : i32, i32
  }
  func.func @transform_2(%arg0: i32) -> (i32, i32, i32) {
    %c0_i32 = arith.constant 0 : i32
    %c0_i32_0 = arith.constant 0 : i32
    %c0_i32_1 = arith.constant 0 : i32
    return %c0_i32, %arg0, %c0_i32_0 : i32, i32, i32
  }
  func.func @transform_3(%arg0: i32) -> (i32, i32, i32) {
    %c0_i32 = arith.constant 0 : i32
    %c0_i32_0 = arith.constant 0 : i32
    %c0_i32_1 = arith.constant 0 : i32
    return %arg0, %c0_i32, %c0_i32_0 : i32, i32, i32
  }
}

</mosaic_0001>

<llo_original>
// kernel: box_loss_forward.1
$region0: #{box_loss_forward.1}
  #allocation0 [shape = 'u32[]', space=smem, size = 0x4, offset = 0x4, fixed_abs, tag = 'smem constant byte address 0x4 - core index']
  #allocation1 [shape = 'u32[144,128]{1,0:T(1,128)}', space=vmem, size = 0x12000, scoped, tag = 'internal scratch']
  %s0 = inlined_call_operand.vmem [shape: f32[8,128,128], index: 0, kind: input, shape index: {}]
  %s1 = inlined_call_operand.vmem [shape: s8[128,128], index: 1, kind: input, shape index: {}]
  %s2 = inlined_call_operand.vmem [shape: bf16[8,128,128], index: 2, kind: input, shape index: {}]
  %s3 = inlined_call_operand.vmem [shape: f32[2,8,128], index: 3, kind: output, shape index: {}]
  %s4 = sld [smem:[#allocation0]]
  $region128: #{box_loss_forward.1} parent=0
    _
  %s6 = ssub.s32 1, %s4
  %s7 = scalar_select 0, %s6, %s4
  $region1: #{box_loss_forward.1} parent=0
    #allocation2 [shape = 'u8[524288]{0}', space=vmem, size = 0x80000, scoped, tag = 'input window, operand 0']
    #allocation3 [shape = 'u8[262144]{0}', space=vmem, size = 0x40000, scoped, tag = 'input window, operand 2']
    loop: start=0, step=1, limit=4
    $region2: #{box_loss_forward.1} parent=1 // loop_pre_header
      _
    $region3: #{box_loss_forward.1} parent=1 // loop_header
      %s9 = sphi 0, %s13
      %p10 = scmp.ge.s32.totalorder %s9, 4
      %s19 = sphi 0, %s21
      %s22 = sphi 0, %s19
      %s23 = sphi 0, %s22
      %s39 = sphi 0, %s23
      %s45 = sphi 0, %s47
      %s48 = sphi 0, %s45
      %s49 = sphi 0, %s48
      %s65 = sphi 0, %s49
      %s71 = sphi 0, %s73
      %s74 = sphi 0, %s71
      %s75 = sphi 0, %s74
      %s91 = sphi 0, %s75
      %s97 = sphi 0, %s99
      %s100 = sphi 0, %s97
      %s101 = sphi 0, %s100
      %s117 = sphi 0, %s101
    $region4: #{box_loss_forward.1} parent=1 // loop_header_branch
      %12 = sbr.rel (%p10) target = $region8
    $region5: #{box_loss_forward.1} parent=1 // loop_body
      %s14 = ssub.s32 %s9, 1
      %s15 = ssub.s32 %s9, 2
      %s16 = sadd.s32 %s9, 1
      %s17 = ssub.s32 %s9, %s16
      %p18 = scmp.eq.s32.totalorder %s17, 0
      %s20 = sadd.s32 %s19, 1
      %s21 = scalar_select %p18, %s19, %s20
      %p24 = pneg %p18
      %p25 = scmp.eq.s32.totalorder %s9, 1
      %p26 = por %p24, %p25
      %p27 = scmp.ne.s32.totalorder %s19, %s22
      %p28 = scmp.eq.s32.totalorder %s9, 0
      %p29 = por %p27, %p28
      %p30 = scmp.ne.s32.totalorder %s19, %s22
      %p31 = scmp.eq.s32.totalorder %s14, 1
      %p32 = por %p30, %p31
      %p33 = scmp.ne.s32.totalorder %s22, %s23
      %p34 = scmp.eq.s32.totalorder %s14, 0
      %p35 = por %p33, %p34
      %p36 = scmp.ne.s32.totalorder %s22, %s23
      %p37 = scmp.eq.s32.totalorder %s15, 1
      %p38 = por %p36, %p37
      %p40 = scmp.ne.s32.totalorder %s23, %s39
      %p41 = scmp.eq.s32.totalorder %s15, 0
      %p42 = por %p40, %p41
      %s43 = ssub.s32 %s9, %s16
      %p44 = scmp.eq.s32.totalorder %s43, 0
      %s46 = sadd.s32 %s45, 1
      %s47 = scalar_select %p44, %s45, %s46
      %p50 = pneg %p44
      %p51 = scmp.eq.s32.totalorder %s9, 1
      %p52 = por %p50, %p51
      %p53 = scmp.ne.s32.totalorder %s45, %s48
      %p54 = scmp.eq.s32.totalorder %s9, 0
      %p55 = por %p53, %p54
      %p56 = scmp.ne.s32.totalorder %s45, %s48
      %p57 = scmp.eq.s32.totalorder %s14, 1
      %p58 = por %p56, %p57
      %p59 = scmp.ne.s32.totalorder %s48, %s49
      %p60 = scmp.eq.s32.totalorder %s14, 0
      %p61 = por %p59, %p60
      %p62 = scmp.ne.s32.totalorder %s48, %s49
      %p63 = scmp.eq.s32.totalorder %s15, 1
      %p64 = por %p62, %p63
      %p66 = scmp.ne.s32.totalorder %s49, %s65
      %p67 = scmp.eq.s32.totalorder %s15, 0
      %p68 = por %p66, %p67
      %s69 = ssub.s32 %s9, %s16
      %p70 = scmp.eq.s32.totalorder %s69, 0
      %s72 = sadd.s32 %s71, 1
      %s73 = scalar_select %p70, %s71, %s72
      %p76 = pneg %p70
      %p77 = scmp.eq.s32.totalorder %s9, 1
      %p78 = por %p76, %p77
      %p79 = scmp.ne.s32.totalorder %s71, %s74
      %p80 = scmp.eq.s32.totalorder %s9, 0
      %p81 = por %p79, %p80
      %p82 = scmp.ne.s32.totalorder %s71, %s74
      %p83 = scmp.eq.s32.totalorder %s14, 1
      %p84 = por %p82, %p83
      %p85 = scmp.ne.s32.totalorder %s74, %s75
      %p86 = scmp.eq.s32.totalorder %s14, 0
      %p87 = por %p85, %p86
      %p88 = scmp.ne.s32.totalorder %s74, %s75
      %p89 = scmp.eq.s32.totalorder %s15, 1
      %p90 = por %p88, %p89
      %p92 = scmp.ne.s32.totalorder %s75, %s91
      %p93 = scmp.eq.s32.totalorder %s15, 0
      %p94 = por %p92, %p93
      %s95 = ssub.s32 %s9, %s16
      %p96 = scmp.eq.s32.totalorder %s95, 0
      %s98 = sadd.s32 %s97, 1
      %s99 = scalar_select %p96, %s97, %s98
      %p102 = pneg %p96
      %p103 = scmp.eq.s32.totalorder %s9, 1
      %p104 = por %p102, %p103
      %p105 = scmp.ne.s32.totalorder %s97, %s100
      %p106 = scmp.eq.s32.totalorder %s9, 0
      %p107 = por %p105, %p106
      %p108 = scmp.ne.s32.totalorder %s97, %s100
      %p109 = scmp.eq.s32.totalorder %s14, 1
      %p110 = por %p108, %p109
      %p111 = scmp.ne.s32.totalorder %s100, %s101
      %p112 = scmp.eq.s32.totalorder %s14, 0
      %p113 = por %p111, %p112
      %p114 = scmp.ne.s32.totalorder %s100, %s101
      %p115 = scmp.eq.s32.totalorder %s15, 1
      %p116 = por %p114, %p115
      %p118 = scmp.ne.s32.totalorder %s101, %s117
      %p119 = scmp.eq.s32.totalorder %s15, 0
      %p120 = por %p118, %p119
      %p121 = scmp.le.s32.totalorder 1, %s9
      %p122 = scmp.lt.s32.totalorder %s9, 3
      %p123 = pnand %p121, %p122
      %p124 = pneg %p123
      // Predicated region
      $region9: #{box_loss_forward.1} parent=5 // pred_check
        _
      $region10: #{box_loss_forward.1} parent=5 // pred_check_branch
        %126 = sbr.rel (%p123) target = $region12
      $region11: #{box_loss_forward.1} parent=5 // pred_region
        %s127 = ssub.s32 %s9, 1
      $region12: #{box_loss_forward.1} parent=5 // pred_fallthru
        _
      %p128 = scmp.lt.s32.totalorder %s9, 2
      // Predicated region
      $region13: #{box_loss_forward.1} parent=5 // pred_check
        %p129 = pneg %p128
      $region14: #{box_loss_forward.1} parent=5 // pred_check_branch
        %131 = sbr.rel (%p129) target = $region16
      $region15: #{box_loss_forward.1} parent=5 // pred_region
        // Predicated region
        $region17: #{box_loss_forward.1} parent=15 // pred_check
          %p132 = pneg %p29
        $region18: #{box_loss_forward.1} parent=15 // pred_check_branch
          %134 = sbr.rel (%p132) target = $region20
        $region19: #{box_loss_forward.1} parent=15 // pred_region
          %s135 = sand.u32 %s19, 1
          %s136 = sand.u32 %s19, 1
          %s137 = smul.addr %s136, 512
          %s138 = scalar_lea.vmem [#allocation2], %s137
          %s139 = smul.u32 8, %s9
          %s140 = smul.addr %s139, 8
          %s141 = scalar_lea.vmem %s0, %s140
          // Predicated region
          $region21: #{box_loss_forward.1} parent=19 // pred_check
            _
          $region22: #{box_loss_forward.1} parent=19 // pred_check_branch
            %143 = sbr.rel (0) target = $region24
          $region23: #{box_loss_forward.1} parent=19 // pred_region
            // Predicated region
            $region25: #{box_loss_forward.1} parent=23 // pred_check
              _
            $region26: #{box_loss_forward.1} parent=23 // pred_check_branch
              %145 = sbr.rel (0) target = $region28
            $region27: #{box_loss_forward.1} parent=23 // pred_region
              // Predicated region
              $region40: #{box_loss_forward.1} parent=27 // pred_check
                _
              $region41: #{box_loss_forward.1} parent=27 // pred_check_branch
                %287 = sbr.rel (0) target = $region43
              $region42: #{box_loss_forward.1} parent=27 // pred_region
                loop: start=0, step=1, limit=1
                $region44: #{box_loss_forward.1} parent=42 // loop_pre_header
                  _
                $region45: #{box_loss_forward.1} parent=42 // loop_header
                  %s289 = sphi 0, %s293
                  %p290 = scmp.ge.s32.totalorder %s289, 1
                  %s294 = sphi %s141, %s141
                  %s295 = sphi %s138, %s138
                $region46: #{box_loss_forward.1} parent=42 // loop_header_branch
                  %292 = sbr.rel (%p290) target = $region50
                $region47: #{box_loss_forward.1} parent=42 // loop_body
                  %v296 = vld [vmem:[%s294] sm:$0xff]
                  %297 = vst [vmem:[%s295] sm:$0xff] %v296
                  %v298 = vld [vmem:[%s294 + $0x8] sm:$0xff]
                  %299 = vst [vmem:[%s295 + $0x8] sm:$0xff] %v298
                  %v300 = vld [vmem:[%s294 + $0x10] sm:$0xff]
                  %301 = vst [vmem:[%s295 + $0x10] sm:$0xff] %v300
                  %v302 = vld [vmem:[%s294 + $0x18] sm:$0xff]
                  %303 = vst [vmem:[%s295 + $0x18] sm:$0xff] %v302
                  %v304 = vld [vmem:[%s294 + $0x20] sm:$0xff]
                  %305 = vst [vmem:[%s295 + $0x20] sm:$0xff] %v304
                  %v306 = vld [vmem:[%s294 + $0x28] sm:$0xff]
                  %307 = vst [vmem:[%s295 + $0x28] sm:$0xff] %v306
                  %v308 = vld [vmem:[%s294 + $0x30] sm:$0xff]
                  %309 = vst [vmem:[%s295 + $0x30] sm:$0xff] %v308
                  %v310 = vld [vmem:[%s294 + $0x38] sm:$0xff]
                  %311 = vst [vmem:[%s295 + $0x38] sm:$0xff] %v310
                  %v312 = vld [vmem:[%s294 + $0x80] sm:$0xff]
                  %313 = vst [vmem:[%s295 + $0x40] sm:$0xff] %v312
                  %v314 = vld [vmem:[%s294 + $0x88] sm:$0xff]
                  %315 = vst [vmem:[%s295 + $0x48] sm:$0xff] %v314
                  %v316 = vld [vmem:[%s294 + $0x90] sm:$0xff]
                  %317 = vst [vmem:[%s295 + $0x50] sm:$0xff] %v316
                  %v318 = vld [vmem:[%s294 + $0x98] sm:$0xff]
                  %319 = vst [vmem:[%s295 + $0x58] sm:$0xff] %v318
                  %v320 = vld [vmem:[%s294 + $0xa0] sm:$0xff]
                  %321 = vst [vmem:[%s295 + $0x60] sm:$0xff] %v320
                  %v322 = vld [vmem:[%s294 + $0xa8] sm:$0xff]
                  %323 = vst [vmem:[%s295 + $0x68] sm:$0xff] %v322
                  %v324 = vld [vmem:[%s294 + $0xb0] sm:$0xff]
                  %325 = vst [vmem:[%s295 + $0x70] sm:$0xff] %v324
                  %v326 = vld [vmem:[%s294 + $0xb8] sm:$0xff]
                  %327 = vst [vmem:[%s295 + $0x78] sm:$0xff] %v326
                  %v328 = vld [vmem:[%s294 + $0x100] sm:$0xff]
                  %329 = vst [vmem:[%s295 + $0x80] sm:$0xff] %v328
                  %v330 = vld [vmem:[%s294 + $0x108] sm:$0xff]
                  %331 = vst [vmem:[%s295 + $0x88] sm:$0xff] %v330
                  %v332 = vld [vmem:[%s294 + $0x110] sm:$0xff]
                  %333 = vst [vmem:[%s295 + $0x90] sm:$0xff] %v332
                  %v334 = vld [vmem:[%s294 + $0x118] sm:$0xff]
                  %335 = vst [vmem:[%s295 + $0x98] sm:$0xff] %v334
                  %v336 = vld [vmem:[%s294 + $0x120] sm:$0xff]
                  %337 = vst [vmem:[%s295 + $0xa0] sm:$0xff] %v336
                  %v338 = vld [vmem:[%s294 + $0x128] sm:$0xff]
                  %339 = vst [vmem:[%s295 + $0xa8] sm:$0xff] %v338
                  %v340 = vld [vmem:[%s294 + $0x130] sm:$0xff]
                  %341 = vst [vmem:[%s295 + $0xb0] sm:$0xff] %v340
                  %v342 = vld [vmem:[%s294 + $0x138] sm:$0xff]
                  %343 = vst [vmem:[%s295 + $0xb8] sm:$0xff] %v342
                  %v344 = vld [vmem:[%s294 + $0x180] sm:$0xff]
                  %345 = vst [vmem:[%s295 + $0xc0] sm:$0xff] %v344
                  %v346 = vld [vmem:[%s294 + $0x188] sm:$0xff]
                  %347 = vst [vmem:[%s295 + $0xc8] sm:$0xff] %v346
                  %v348 = vld [vmem:[%s294 + $0x190] sm:$0xff]
                  %349 = vst [vmem:[%s295 + $0xd0] sm:$0xff] %v348
                  %v350 = vld [vmem:[%s294 + $0x198] sm:$0xff]
                  %351 = vst [vmem:[%s295 + $0xd8] sm:$0xff] %v350
                  %v352 = vld [vmem:[%s294 + $0x1a0] sm:$0xff]
                  %353 = vst [vmem:[%s295 + $0xe0] sm:$0xff] %v352
                  %v354 = vld [vmem:[%s294 + $0x1a8] sm:$0xff]
                  %355 = vst [vmem:[%s295 + $0xe8] sm:$0xff] %v354
                  %v356 = vld [vmem:[%s294 + $0x1b0] sm:$0xff]
                  %357 = vst [vmem:[%s295 + $0xf0] sm:$0xff] %v356
                  %v358 = vld [vmem:[%s294 + $0x1b8] sm:$0xff]
                  %359 = vst [vmem:[%s295 + $0xf8] sm:$0xff] %v358
                  %v360 = vld [vmem:[%s294 + $0x200] sm:$0xff]
                  %361 = vst [vmem:[%s295 + $0x100] sm:$0xff] %v360
                  %v362 = vld [vmem:[%s294 + $0x208] sm:$0xff]
                  %363 = vst [vmem:[%s295 + $0x108] sm:$0xff] %v362
                  %v364 = vld [vmem:[%s294 + $0x210] sm:$0xff]
                  %365 = vst [vmem:[%s295 + $0x110] sm:$0xff] %v364
                  %v366 = vld [vmem:[%s294 + $0x218] sm:$0xff]
                  %367 = vst [vmem:[%s295 + $0x118] sm:$0xff] %v366
                  %v368 = vld [vmem:[%s294 + $0x220] sm:$0xff]
                  %369 = vst [vmem:[%s295 + $0x120] sm:$0xff] %v368
                  %v370 = vld [vmem:[%s294 + $0x228] sm:$0xff]
                  %371 = vst [vmem:[%s295 + $0x128] sm:$0xff] %v370
                  %v372 = vld [vmem:[%s294 + $0x230] sm:$0xff]
                  %373 = vst [vmem:[%s295 + $0x130] sm:$0xff] %v372
                  %v374 = vld [vmem:[%s294 + $0x238] sm:$0xff]
                  %375 = vst [vmem:[%s295 + $0x138] sm:$0xff] %v374
                  %v376 = vld [vmem:[%s294 + $0x280] sm:$0xff]
                  %377 = vst [vmem:[%s295 + $0x140] sm:$0xff] %v376
                  %v378 = vld [vmem:[%s294 + $0x288] sm:$0xff]
                  %379 = vst [vmem:[%s295 + $0x148] sm:$0xff] %v378
                  %v380 = vld [vmem:[%s294 + $0x290] sm:$0xff]
                  %381 = vst [vmem:[%s295 + $0x150] sm:$0xff] %v380
                  %v382 = vld [vmem:[%s294 + $0x298] sm:$0xff]
                  %383 = vst [vmem:[%s295 + $0x158] sm:$0xff] %v382
                  %v384 = vld [vmem:[%s294 + $0x2a0] sm:$0xff]
                  %385 = vst [vmem:[%s295 + $0x160] sm:$0xff] %v384
                  %v386 = vld [vmem:[%s294 + $0x2a8] sm:$0xff]
                  %387 = vst [vmem:[%s295 + $0x168] sm:$0xff] %v386
                  %v388 = vld [vmem:[%s294 + $0x2b0] sm:$0xff]
                  %389 = vst [vmem:[%s295 + $0x170] sm:$0xff] %v388
                  %v390 = vld [vmem:[%s294 + $0x2b8] sm:$0xff]
                  %391 = vst [vmem:[%s295 + $0x178] sm:$0xff] %v390
                  %v392 = vld [vmem:[%s294 + $0x300] sm:$0xff]
                  %393 = vst [vmem:[%s295 + $0x180] sm:$0xff] %v392
                  %v394 = vld [vmem:[%s294 + $0x308] sm:$0xff]
                  %395 = vst [vmem:[%s295 + $0x188] sm:$0xff] %v394
                  %v396 = vld [vmem:[%s294 + $0x310] sm:$0xff]
                  %397 = vst [vmem:[%s295 + $0x190] sm:$0xff] %v396
                  %v398 = vld [vmem:[%s294 + $0x318] sm:$0xff]
                  %399 = vst [vmem:[%s295 + $0x198] sm:$0xff] %v398
                  %v400 = vld [vmem:[%s294 + $0x320] sm:$0xff]
                  %401 = vst [vmem:[%s295 + $0x1a0] sm:$0xff] %v400
                  %v402 = vld [vmem:[%s294 + $0x328] sm:$0xff]
                  %403 = vst [vmem:[%s295 + $0x1a8] sm:$0xff] %v402
                  %v404 = vld [vmem:[%s294 + $0x330] sm:$0xff]
                  %405 = vst [vmem:[%s295 + $0x1b0] sm:$0xff] %v404
                  %v406 = vld [vmem:[%s294 + $0x338] sm:$0xff]
                  %407 = vst [vmem:[%s295 + $0x1b8] sm:$0xff] %v406
                  %v408 = vld [vmem:[%s294 + $0x380] sm:$0xff]
                  %409 = vst [vmem:[%s295 + $0x1c0] sm:$0xff] %v408
                  %v410 = vld [vmem:[%s294 + $0x388] sm:$0xff]
                  %411 = vst [vmem:[%s295 + $0x1c8] sm:$0xff] %v410
                  %v412 = vld [vmem:[%s294 + $0x390] sm:$0xff]
                  %413 = vst [vmem:[%s295 + $0x1d0] sm:$0xff] %v412
                  %v414 = vld [vmem:[%s294 + $0x398] sm:$0xff]
                  %415 = vst [vmem:[%s295 + $0x1d8] sm:$0xff] %v414
                  %v416 = vld [vmem:[%s294 + $0x3a0] sm:$0xff]
                  %417 = vst [vmem:[%s295 + $0x1e0] sm:$0xff] %v416
                  %v418 = vld [vmem:[%s294 + $0x3a8] sm:$0xff]
                  %419 = vst [vmem:[%s295 + $0x1e8] sm:$0xff] %v418
                  %v420 = vld [vmem:[%s294 + $0x3b0] sm:$0xff]
                  %421 = vst [vmem:[%s295 + $0x1f0] sm:$0xff] %v420
                  %v422 = vld [vmem:[%s294 + $0x3b8] sm:$0xff]
                  %423 = vst [vmem:[%s295 + $0x1f8] sm:$0xff] %v422
                $region48: #{box_loss_forward.1} parent=42 // loop_footer
                  %s293 = sadd.s32 1, %s289
                $region49: #{box_loss_forward.1} parent=42 // loop_footer_branch
                  %288 = sbr.rel target = $region45
                $region50: #{box_loss_forward.1} parent=42 // loop_exit
                  _
              $region43: #{box_loss_forward.1} parent=27 // pred_fallthru
                _
              // Predicated region
              $region51: #{box_loss_forward.1} parent=27 // pred_check
                _
              $region52: #{box_loss_forward.1} parent=27 // pred_check_branch
                %425 = sbr.rel target = $region54
              $region53: #{box_loss_forward.1} parent=27 // pred_region
                _
              $region54: #{box_loss_forward.1} parent=27 // pred_fallthru
                _
            $region28: #{box_loss_forward.1} parent=23 // pred_fallthru
              _
            // Predicated region
            $region29: #{box_loss_forward.1} parent=23 // pred_check
              _
            $region30: #{box_loss_forward.1} parent=23 // pred_check_branch
              %147 = sbr.rel target = $region32
            $region31: #{box_loss_forward.1} parent=23 // pred_region
              %s149 = ssub.s32 256, 1
              loop: start=0, step=1, limit=1
              $region33: #{box_loss_forward.1} parent=31 // loop_pre_header
                _
              $region34: #{box_loss_forward.1} parent=31 // loop_header
                %s151 = sphi 0, %s155
                %p152 = scmp.ge.s32.totalorder %s151, 1
                %s156 = sphi %s141, %s141
                %s157 = sphi %s138, %s138
              $region35: #{box_loss_forward.1} parent=31 // loop_header_branch
                %154 = sbr.rel (%p152) target = $region39
              $region36: #{box_loss_forward.1} parent=31 // loop_body
                %v158 = vld [vmem:[%s156] sm:%s149]
                %159 = vst [vmem:[%s157] sm:%s149] %v158
                %v160 = vld [vmem:[%s156 + $0x8] sm:%s149]
                %161 = vst [vmem:[%s157 + $0x8] sm:%s149] %v160
                %v162 = vld [vmem:[%s156 + $0x10] sm:%s149]
                %163 = vst [vmem:[%s157 + $0x10] sm:%s149] %v162
                %v164 = vld [vmem:[%s156 + $0x18] sm:%s149]
                %165 = vst [vmem:[%s157 + $0x18] sm:%s149] %v164
                %v166 = vld [vmem:[%s156 + $0x20] sm:%s149]
                %167 = vst [vmem:[%s157 + $0x20] sm:%s149] %v166
                %v168 = vld [vmem:[%s156 + $0x28] sm:%s149]
                %169 = vst [vmem:[%s157 + $0x28] sm:%s149] %v168
                %v170 = vld [vmem:[%s156 + $0x30] sm:%s149]
                %171 = vst [vmem:[%s157 + $0x30] sm:%s149] %v170
                %v172 = vld [vmem:[%s156 + $0x38] sm:%s149]
                %173 = vst [vmem:[%s157 + $0x38] sm:%s149] %v172
                %v174 = vld [vmem:[%s156 + $0x80] sm:%s149]
                %175 = vst [vmem:[%s157 + $0x40] sm:%s149] %v174
                %v176 = vld [vmem:[%s156 + $0x88] sm:%s149]
                %177 = vst [vmem:[%s157 + $0x48] sm:%s149] %v176
                %v178 = vld [vmem:[%s156 + $0x90] sm:%s149]
                %179 = vst [vmem:[%s157 + $0x50] sm:%s149] %v178
                %v180 = vld [vmem:[%s156 + $0x98] sm:%s149]
                %181 = vst [vmem:[%s157 + $0x58] sm:%s149] %v180
                %v182 = vld [vmem:[%s156 + $0xa0] sm:%s149]
                %183 = vst [vmem:[%s157 + $0x60] sm:%s149] %v182
                %v184 = vld [vmem:[%s156 + $0xa8] sm:%s149]
                %185 = vst [vmem:[%s157 + $0x68] sm:%s149] %v184
                %v186 = vld [vmem:[%s156 + $0xb0] sm:%s149]
                %187 = vst [vmem:[%s157 + $0x70] sm:%s149] %v186
                %v188 = vld [vmem:[%s156 + $0xb8] sm:%s149]
                %189 = vst [vmem:[%s157 + $0x78] sm:%s149] %v188
                %v190 = vld [vmem:[%s156 + $0x100] sm:%s149]
                %191 = vst [vmem:[%s157 + $0x80] sm:%s149] %v190
                %v192 = vld [vmem:[%s156 + $0x108] sm:%s149]
                %193 = vst [vmem:[%s157 + $0x88] sm:%s149] %v192
                %v194 = vld [vmem:[%s156 + $0x110] sm:%s149]
                %195 = vst [vmem:[%s157 + $0x90] sm:%s149] %v194
                %v196 = vld [vmem:[%s156 + $0x118] sm:%s149]
                %197 = vst [vmem:[%s157 + $0x98] sm:%s149] %v196
                %v198 = vld [vmem:[%s156 + $0x120] sm:%s149]
                %199 = vst [vmem:[%s157 + $0xa0] sm:%s149] %v198
                %v200 = vld [vmem:[%s156 + $0x128] sm:%s149]
                %201 = vst [vmem:[%s157 + $0xa8] sm:%s149] %v200
                %v202 = vld [vmem:[%s156 + $0x130] sm:%s149]
                %203 = vst [vmem:[%s157 + $0xb0] sm:%s149] %v202
                %v204 = vld [vmem:[%s156 + $0x138] sm:%s149]
                %205 = vst [vmem:[%s157 + $0xb8] sm:%s149] %v204
                %v206 = vld [vmem:[%s156 + $0x180] sm:%s149]
                %207 = vst [vmem:[%s157 + $0xc0] sm:%s149] %v206
                %v208 = vld [vmem:[%s156 + $0x188] sm:%s149]
                %209 = vst [vmem:[%s157 + $0xc8] sm:%s149] %v208
                %v210 = vld [vmem:[%s156 + $0x190] sm:%s149]
                %211 = vst [vmem:[%s157 + $0xd0] sm:%s149] %v210
                %v212 = vld [vmem:[%s156 + $0x198] sm:%s149]
                %213 = vst [vmem:[%s157 + $0xd8] sm:%s149] %v212
                %v214 = vld [vmem:[%s156 + $0x1a0] sm:%s149]
                %215 = vst [vmem:[%s157 + $0xe0] sm:%s149] %v214
                %v216 = vld [vmem:[%s156 + $0x1a8] sm:%s149]
                %217 = vst [vmem:[%s157 + $0xe8] sm:%s149] %v216
                %v218 = vld [vmem:[%s156 + $0x1b0] sm:%s149]
                %219 = vst [vmem:[%s157 + $0xf0] sm:%s149] %v218
                %v220 = vld [vmem:[%s156 + $0x1b8] sm:%s149]
                %221 = vst [vmem:[%s157 + $0xf8] sm:%s149] %v220
                %v222 = vld [vmem:[%s156 + $0x200] sm:%s149]
                %223 = vst [vmem:[%s157 + $0x100] sm:%s149] %v222
                %v224 = vld [vmem:[%s156 + $0x208] sm:%s149]
                %225 = vst [vmem:[%s157 + $0x108] sm:%s149] %v224
                %v226 = vld [vmem:[%s156 + $0x210] sm:%s149]
                %227 = vst [vmem:[%s157 + $0x110] sm:%s149] %v226
                %v228 = vld [vmem:[%s156 + $0x218] sm:%s149]
                %229 = vst [vmem:[%s157 + $0x118] sm:%s149] %v228
                %v230 = vld [vmem:[%s156 + $0x220] sm:%s149]
                %231 = vst [vmem:[%s157 + $0x120] sm:%s149] %v230
                %v232 = vld [vmem:[%s156 + $0x228] sm:%s149]
                %233 = vst [vmem:[%s157 + $0x128] sm:%s149] %v232
                %v234 = vld [vmem:[%s156 + $0x230] sm:%s149]
                %235 = vst [vmem:[%s157 + $0x130] sm:%s149] %v234
                %v236 = vld [vmem:[%s156 + $0x238] sm:%s149]
                %237 = vst [vmem:[%s157 + $0x138] sm:%s149] %v236
                %v238 = vld [vmem:[%s156 + $0x280] sm:%s149]
                %239 = vst [vmem:[%s157 + $0x140] sm:%s149] %v238
                %v240 = vld [vmem:[%s156 + $0x288] sm:%s149]
                %241 = vst [vmem:[%s157 + $0x148] sm:%s149] %v240
                %v242 = vld [vmem:[%s156 + $0x290] sm:%s149]
                %243 = vst [vmem:[%s157 + $0x150] sm:%s149] %v242
                %v244 = vld [vmem:[%s156 + $0x298] sm:%s149]
                %245 = vst [vmem:[%s157 + $0x158] sm:%s149] %v244
                %v246 = vld [vmem:[%s156 + $0x2a0] sm:%s149]
                %247 = vst [vmem:[%s157 + $0x160] sm:%s149] %v246
                %v248 = vld [vmem:[%s156 + $0x2a8] sm:%s149]
                %249 = vst [vmem:[%s157 + $0x168] sm:%s149] %v248
                %v250 = vld [vmem:[%s156 + $0x2b0] sm:%s149]
                %251 = vst [vmem:[%s157 + $0x170] sm:%s149] %v250
                %v252 = vld [vmem:[%s156 + $0x2b8] sm:%s149]
                %253 = vst [vmem:[%s157 + $0x178] sm:%s149] %v252
                %v254 = vld [vmem:[%s156 + $0x300] sm:%s149]
                %255 = vst [vmem:[%s157 + $0x180] sm:%s149] %v254
                %v256 = vld [vmem:[%s156 + $0x308] sm:%s149]
                %257 = vst [vmem:[%s157 + $0x188] sm:%s149] %v256
                %v258 = vld [vmem:[%s156 + $0x310] sm:%s149]
                %259 = vst [vmem:[%s157 + $0x190] sm:%s149] %v258
                %v260 = vld [vmem:[%s156 + $0x318] sm:%s149]
                %261 = vst [vmem:[%s157 + $0x198] sm:%s149] %v260
                %v262 = vld [vmem:[%s156 + $0x320] sm:%s149]
                %263 = vst [vmem:[%s157 + $0x1a0] sm:%s149] %v262
                %v264 = vld [vmem:[%s156 + $0x328] sm:%s149]
                %265 = vst [vmem:[%s157 + $0x1a8] sm:%s149] %v264
                %v266 = vld [vmem:[%s156 + $0x330] sm:%s149]
                %267 = vst [vmem:[%s157 + $0x1b0] sm:%s149] %v266
                %v268 = vld [vmem:[%s156 + $0x338] sm:%s149]
                %269 = vst [vmem:[%s157 + $0x1b8] sm:%s149] %v268
                %v270 = vld [vmem:[%s156 + $0x380] sm:%s149]
                %271 = vst [vmem:[%s157 + $0x1c0] sm:%s149] %v270
                %v272 = vld [vmem:[%s156 + $0x388] sm:%s149]
                %273 = vst [vmem:[%s157 + $0x1c8] sm:%s149] %v272
                %v274 = vld [vmem:[%s156 + $0x390] sm:%s149]
                %275 = vst [vmem:[%s157 + $0x1d0] sm:%s149] %v274
                %v276 = vld [vmem:[%s156 + $0x398] sm:%s149]
                %277 = vst [vmem:[%s157 + $0x1d8] sm:%s149] %v276
                %v278 = vld [vmem:[%s156 + $0x3a0] sm:%s149]
                %279 = vst [vmem:[%s157 + $0x1e0] sm:%s149] %v278
                %v280 = vld [vmem:[%s156 + $0x3a8] sm:%s149]
                %281 = vst [vmem:[%s157 + $0x1e8] sm:%s149] %v280
                %v282 = vld [vmem:[%s156 + $0x3b0] sm:%s149]
                %283 = vst [vmem:[%s157 + $0x1f0] sm:%s149] %v282
                %v284 = vld [vmem:[%s156 + $0x3b8] sm:%s149]
                %285 = vst [vmem:[%s157 + $0x1f8] sm:%s149] %v284
              $region37: #{box_loss_forward.1} parent=31 // loop_footer
                %s155 = sadd.s32 1, %s151
              $region38: #{box_loss_forward.1} parent=31 // loop_footer_branch
                %150 = sbr.rel target = $region34
              $region39: #{box_loss_forward.1} parent=31 // loop_exit
                _
            $region32: #{box_loss_forward.1} parent=23 // pred_fallthru
              _
          $region24: #{box_loss_forward.1} parent=19 // pred_fallthru
            _
          %426 = vnop
        $region20: #{box_loss_forward.1} parent=15 // pred_fallthru
          _
        // Predicated region
        $region55: #{box_loss_forward.1} parent=15 // pred_check
          %p427 = pneg %p55
        $region56: #{box_loss_forward.1} parent=15 // pred_check_branch
          %429 = sbr.rel (%p427) target = $region58
        $region57: #{box_loss_forward.1} parent=15 // pred_region
          %s430 = smul.u32 2, %s9
          %p431 = scmp.lt.s32.totalorder %s430, 3
          %s432 = scalar_select %p431, %s430, 3
          %s433 = smul.addr %s432, 8
          %s434 = scalar_lea.vmem %s1, %s433
          %s435 = smul.u32 2, %s9
        $region58: #{box_loss_forward.1} parent=15 // pred_fallthru
          _
        // Predicated region
        $region59: #{box_loss_forward.1} parent=15 // pred_check
          %p436 = pneg %p81
        $region60: #{box_loss_forward.1} parent=15 // pred_check_branch
          %438 = sbr.rel (%p436) target = $region62
        $region61: #{box_loss_forward.1} parent=15 // pred_region
          %s439 = sand.u32 %s71, 1
          %s440 = sand.u32 %s71, 1
          %s441 = smul.addr %s440, 256
          %s442 = scalar_lea.vmem [#allocation3], %s441
          %s443 = smul.u32 8, %s9
          %s444 = smul.addr %s443, 4
          %s445 = scalar_lea.vmem %s2, %s444
          // Predicated region
          $region63: #{box_loss_forward.1} parent=61 // pred_check
            _
          $region64: #{box_loss_forward.1} parent=61 // pred_check_branch
            %447 = sbr.rel (0) target = $region66
          $region65: #{box_loss_forward.1} parent=61 // pred_region
            // Predicated region
            $region67: #{box_loss_forward.1} parent=65 // pred_check
              _
            $region68: #{box_loss_forward.1} parent=65 // pred_check_branch
              %449 = sbr.rel target = $region70
            $region69: #{box_loss_forward.1} parent=65 // pred_region
              // Predicated region
              $region82: #{box_loss_forward.1} parent=69 // pred_check
                _
              $region83: #{box_loss_forward.1} parent=69 // pred_check_branch
                %591 = sbr.rel (0) target = $region85
              $region84: #{box_loss_forward.1} parent=69 // pred_region
                loop: start=0, step=1, limit=1
                $region86: #{box_loss_forward.1} parent=84 // loop_pre_header
                  _
                $region87: #{box_loss_forward.1} parent=84 // loop_header
                  %s593 = sphi 0, %s597
                  %p594 = scmp.ge.s32.totalorder %s593, 1
                  %s598 = sphi %s445, %s445
                  %s599 = sphi %s442, %s442
                $region88: #{box_loss_forward.1} parent=84 // loop_header_branch
                  %596 = sbr.rel (%p594) target = $region92
                $region89: #{box_loss_forward.1} parent=84 // loop_body
                  _
                $region90: #{box_loss_forward.1} parent=84 // loop_footer
                  %s597 = sadd.s32 1, %s593
                $region91: #{box_loss_forward.1} parent=84 // loop_footer_branch
                  %592 = sbr.rel target = $region87
                $region92: #{box_loss_forward.1} parent=84 // loop_exit
                  _
                %s601 = ssub.s32 16, 1
                loop: start=0, step=1, limit=1
                $region93: #{box_loss_forward.1} parent=84 // loop_pre_header
                  _
                $region94: #{box_loss_forward.1} parent=84 // loop_header
                  %s603 = sphi 0, %s607
                  %p604 = scmp.ge.s32.totalorder %s603, 1
                  %s608 = sphi %s445, %s445
                  %s609 = sphi %s442, %s442
                $region95: #{box_loss_forward.1} parent=84 // loop_header_branch
                  %606 = sbr.rel (%p604) target = $region99
                $region96: #{box_loss_forward.1} parent=84 // loop_body
                  %v610 = vld [vmem:[%s608] sm:%s601]
                  %611 = vst [vmem:[%s609] sm:%s601] %v610
                  %v612 = vld [vmem:[%s608 + $0x4] sm:%s601]
                  %613 = vst [vmem:[%s609 + $0x4] sm:%s601] %v612
                  %v614 = vld [vmem:[%s608 + $0x8] sm:%s601]
                  %615 = vst [vmem:[%s609 + $0x8] sm:%s601] %v614
                  %v616 = vld [vmem:[%s608 + $0xc] sm:%s601]
                  %617 = vst [vmem:[%s609 + $0xc] sm:%s601] %v616
                  %v618 = vld [vmem:[%s608 + $0x10] sm:%s601]
                  %619 = vst [vmem:[%s609 + $0x10] sm:%s601] %v618
                  %v620 = vld [vmem:[%s608 + $0x14] sm:%s601]
                  %621 = vst [vmem:[%s609 + $0x14] sm:%s601] %v620
                  %v622 = vld [vmem:[%s608 + $0x18] sm:%s601]
                  %623 = vst [vmem:[%s609 + $0x18] sm:%s601] %v622
                  %v624 = vld [vmem:[%s608 + $0x1c] sm:%s601]
                  %625 = vst [vmem:[%s609 + $0x1c] sm:%s601] %v624
                  %v626 = vld [vmem:[%s608 + $0x40] sm:%s601]
                  %627 = vst [vmem:[%s609 + $0x20] sm:%s601] %v626
                  %v628 = vld [vmem:[%s608 + $0x44] sm:%s601]
                  %629 = vst [vmem:[%s609 + $0x24] sm:%s601] %v628
                  %v630 = vld [vmem:[%s608 + $0x48] sm:%s601]
                  %631 = vst [vmem:[%s609 + $0x28] sm:%s601] %v630
                  %v632 = vld [vmem:[%s608 + $0x4c] sm:%s601]
                  %633 = vst [vmem:[%s609 + $0x2c] sm:%s601] %v632
                  %v634 = vld [vmem:[%s608 + $0x50] sm:%s601]
                  %635 = vst [vmem:[%s609 + $0x30] sm:%s601] %v634
                  %v636 = vld [vmem:[%s608 + $0x54] sm:%s601]
                  %637 = vst [vmem:[%s609 + $0x34] sm:%s601] %v636
                  %v638 = vld [vmem:[%s608 + $0x58] sm:%s601]
                  %639 = vst [vmem:[%s609 + $0x38] sm:%s601] %v638
                  %v640 = vld [vmem:[%s608 + $0x5c] sm:%s601]
                  %641 = vst [vmem:[%s609 + $0x3c] sm:%s601] %v640
                  %v642 = vld [vmem:[%s608 + $0x80] sm:%s601]
                  %643 = vst [vmem:[%s609 + $0x40] sm:%s601] %v642
                  %v644 = vld [vmem:[%s608 + $0x84] sm:%s601]
                  %645 = vst [vmem:[%s609 + $0x44] sm:%s601] %v644
                  %v646 = vld [vmem:[%s608 + $0x88] sm:%s601]
                  %647 = vst [vmem:[%s609 + $0x48] sm:%s601] %v646
                  %v648 = vld [vmem:[%s608 + $0x8c] sm:%s601]
                  %649 = vst [vmem:[%s609 + $0x4c] sm:%s601] %v648
                  %v650 = vld [vmem:[%s608 + $0x90] sm:%s601]
                  %651 = vst [vmem:[%s609 + $0x50] sm:%s601] %v650
                  %v652 = vld [vmem:[%s608 + $0x94] sm:%s601]
                  %653 = vst [vmem:[%s609 + $0x54] sm:%s601] %v652
                  %v654 = vld [vmem:[%s608 + $0x98] sm:%s601]
                  %655 = vst [vmem:[%s609 + $0x58] sm:%s601] %v654
                  %v656 = vld [vmem:[%s608 + $0x9c] sm:%s601]
                  %657 = vst [vmem:[%s609 + $0x5c] sm:%s601] %v656
                  %v658 = vld [vmem:[%s608 + $0xc0] sm:%s601]
                  %659 = vst [vmem:[%s609 + $0x60] sm:%s601] %v658
                  %v660 = vld [vmem:[%s608 + $0xc4] sm:%s601]
                  %661 = vst [vmem:[%s609 + $0x64] sm:%s601] %v660
                  %v662 = vld [vmem:[%s608 + $0xc8] sm:%s601]
                  %663 = vst [vmem:[%s609 + $0x68] sm:%s601] %v662
                  %v664 = vld [vmem:[%s608 + $0xcc] sm:%s601]
                  %665 = vst [vmem:[%s609 + $0x6c] sm:%s601] %v664
                  %v666 = vld [vmem:[%s608 + $0xd0] sm:%s601]
                  %667 = vst [vmem:[%s609 + $0x70] sm:%s601] %v666
                  %v668 = vld [vmem:[%s608 + $0xd4] sm:%s601]
                  %669 = vst [vmem:[%s609 + $0x74] sm:%s601] %v668
                  %v670 = vld [vmem:[%s608 + $0xd8] sm:%s601]
                  %671 = vst [vmem:[%s609 + $0x78] sm:%s601] %v670
                  %v672 = vld [vmem:[%s608 + $0xdc] sm:%s601]
                  %673 = vst [vmem:[%s609 + $0x7c] sm:%s601] %v672
                  %v674 = vld [vmem:[%s608 + $0x100] sm:%s601]
                  %675 = vst [vmem:[%s609 + $0x80] sm:%s601] %v674
                  %v676 = vld [vmem:[%s608 + $0x104] sm:%s601]
                  %677 = vst [vmem:[%s609 + $0x84] sm:%s601] %v676
                  %v678 = vld [vmem:[%s608 + $0x108] sm:%s601]
                  %679 = vst [vmem:[%s609 + $0x88] sm:%s601] %v678
                  %v680 = vld [vmem:[%s608 + $0x10c] sm:%s601]
                  %681 = vst [vmem:[%s609 + $0x8c] sm:%s601] %v680
                  %v682 = vld [vmem:[%s608 + $0x110] sm:%s601]
                  %683 = vst [vmem:[%s609 + $0x90] sm:%s601] %v682
                  %v684 = vld [vmem:[%s608 + $0x114] sm:%s601]
                  %685 = vst [vmem:[%s609 + $0x94] sm:%s601] %v684
                  %v686 = vld [vmem:[%s608 + $0x118] sm:%s601]
                  %687 = vst [vmem:[%s609 + $0x98] sm:%s601] %v686
                  %v688 = vld [vmem:[%s608 + $0x11c] sm:%s601]
                  %689 = vst [vmem:[%s609 + $0x9c] sm:%s601] %v688
                  %v690 = vld [vmem:[%s608 + $0x140] sm:%s601]
                  %691 = vst [vmem:[%s609 + $0xa0] sm:%s601] %v690
                  %v692 = vld [vmem:[%s608 + $0x144] sm:%s601]
                  %693 = vst [vmem:[%s609 + $0xa4] sm:%s601] %v692
                  %v694 = vld [vmem:[%s608 + $0x148] sm:%s601]
                  %695 = vst [vmem:[%s609 + $0xa8] sm:%s601] %v694
                  %v696 = vld [vmem:[%s608 + $0x14c] sm:%s601]
                  %697 = vst [vmem:[%s609 + $0xac] sm:%s601] %v696
                  %v698 = vld [vmem:[%s608 + $0x150] sm:%s601]
                  %699 = vst [vmem:[%s609 + $0xb0] sm:%s601] %v698
                  %v700 = vld [vmem:[%s608 + $0x154] sm:%s601]
                  %701 = vst [vmem:[%s609 + $0xb4] sm:%s601] %v700
                  %v702 = vld [vmem:[%s608 + $0x158] sm:%s601]
                  %703 = vst [vmem:[%s609 + $0xb8] sm:%s601] %v702
                  %v704 = vld [vmem:[%s608 + $0x15c] sm:%s601]
                  %705 = vst [vmem:[%s609 + $0xbc] sm:%s601] %v704
                  %v706 = vld [vmem:[%s608 + $0x180] sm:%s601]
                  %707 = vst [vmem:[%s609 + $0xc0] sm:%s601] %v706
                  %v708 = vld [vmem:[%s608 + $0x184] sm:%s601]
                  %709 = vst [vmem:[%s609 + $0xc4] sm:%s601] %v708
                  %v710 = vld [vmem:[%s608 + $0x188] sm:%s601]
                  %711 = vst [vmem:[%s609 + $0xc8] sm:%s601] %v710
                  %v712 = vld [vmem:[%s608 + $0x18c] sm:%s601]
                  %713 = vst [vmem:[%s609 + $0xcc] sm:%s601] %v712
                  %v714 = vld [vmem:[%s608 + $0x190] sm:%s601]
                  %715 = vst [vmem:[%s609 + $0xd0] sm:%s601] %v714
                  %v716 = vld [vmem:[%s608 + $0x194] sm:%s601]
                  %717 = vst [vmem:[%s609 + $0xd4] sm:%s601] %v716
                  %v718 = vld [vmem:[%s608 + $0x198] sm:%s601]
                  %719 = vst [vmem:[%s609 + $0xd8] sm:%s601] %v718
                  %v720 = vld [vmem:[%s608 + $0x19c] sm:%s601]
                  %721 = vst [vmem:[%s609 + $0xdc] sm:%s601] %v720
                  %v722 = vld [vmem:[%s608 + $0x1c0] sm:%s601]
                  %723 = vst [vmem:[%s609 + $0xe0] sm:%s601] %v722
                  %v724 = vld [vmem:[%s608 + $0x1c4] sm:%s601]
                  %725 = vst [vmem:[%s609 + $0xe4] sm:%s601] %v724
                  %v726 = vld [vmem:[%s608 + $0x1c8] sm:%s601]
                  %727 = vst [vmem:[%s609 + $0xe8] sm:%s601] %v726
                  %v728 = vld [vmem:[%s608 + $0x1cc] sm:%s601]
                  %729 = vst [vmem:[%s609 + $0xec] sm:%s601] %v728
                  %v730 = vld [vmem:[%s608 + $0x1d0] sm:%s601]
                  %731 = vst [vmem:[%s609 + $0xf0] sm:%s601] %v730
                  %v732 = vld [vmem:[%s608 + $0x1d4] sm:%s601]
                  %733 = vst [vmem:[%s609 + $0xf4] sm:%s601] %v732
                  %v734 = vld [vmem:[%s608 + $0x1d8] sm:%s601]
                  %735 = vst [vmem:[%s609 + $0xf8] sm:%s601] %v734
                  %v736 = vld [vmem:[%s608 + $0x1dc] sm:%s601]
                  %737 = vst [vmem:[%s609 + $0xfc] sm:%s601] %v736
                $region97: #{box_loss_forward.1} parent=84 // loop_footer
                  %s607 = sadd.s32 1, %s603
                $region98: #{box_loss_forward.1} parent=84 // loop_footer_branch
                  %602 = sbr.rel target = $region94
                $region99: #{box_loss_forward.1} parent=84 // loop_exit
                  _
              $region85: #{box_loss_forward.1} parent=69 // pred_fallthru
                _
            $region70: #{box_loss_forward.1} parent=65 // pred_fallthru
              _
            // Predicated region
            $region71: #{box_loss_forward.1} parent=65 // pred_check
              _
            $region72: #{box_loss_forward.1} parent=65 // pred_check_branch
              %451 = sbr.rel (0) target = $region74
            $region73: #{box_loss_forward.1} parent=65 // pred_region
              %s453 = ssub.s32 16, 1
              loop: start=0, step=1, limit=1
              $region75: #{box_loss_forward.1} parent=73 // loop_pre_header
                _
              $region76: #{box_loss_forward.1} parent=73 // loop_header
                %s455 = sphi 0, %s459
                %p456 = scmp.ge.s32.totalorder %s455, 1
                %s460 = sphi %s445, %s445
                %s461 = sphi %s442, %s442
              $region77: #{box_loss_forward.1} parent=73 // loop_header_branch
                %458 = sbr.rel (%p456) target = $region81
              $region78: #{box_loss_forward.1} parent=73 // loop_body
                %v462 = vld [vmem:[%s460] sm:%s453]
                %463 = vst [vmem:[%s461] sm:%s453] %v462
                %v464 = vld [vmem:[%s460 + $0x4] sm:%s453]
                %465 = vst [vmem:[%s461 + $0x4] sm:%s453] %v464
                %v466 = vld [vmem:[%s460 + $0x8] sm:%s453]
                %467 = vst [vmem:[%s461 + $0x8] sm:%s453] %v466
                %v468 = vld [vmem:[%s460 + $0xc] sm:%s453]
                %469 = vst [vmem:[%s461 + $0xc] sm:%s453] %v468
                %v470 = vld [vmem:[%s460 + $0x10] sm:%s453]
                %471 = vst [vmem:[%s461 + $0x10] sm:%s453] %v470
                %v472 = vld [vmem:[%s460 + $0x14] sm:%s453]
                %473 = vst [vmem:[%s461 + $0x14] sm:%s453] %v472
                %v474 = vld [vmem:[%s460 + $0x18] sm:%s453]
                %475 = vst [vmem:[%s461 + $0x18] sm:%s453] %v474
                %v476 = vld [vmem:[%s460 + $0x1c] sm:%s453]
                %477 = vst [vmem:[%s461 + $0x1c] sm:%s453] %v476
                %v478 = vld [vmem:[%s460 + $0x40] sm:%s453]
                %479 = vst [vmem:[%s461 + $0x20] sm:%s453] %v478
                %v480 = vld [vmem:[%s460 + $0x44] sm:%s453]
                %481 = vst [vmem:[%s461 + $0x24] sm:%s453] %v480
                %v482 = vld [vmem:[%s460 + $0x48] sm:%s453]
                %483 = vst [vmem:[%s461 + $0x28] sm:%s453] %v482
                %v484 = vld [vmem:[%s460 + $0x4c] sm:%s453]
                %485 = vst [vmem:[%s461 + $0x2c] sm:%s453] %v484
                %v486 = vld [vmem:[%s460 + $0x50] sm:%s453]
                %487 = vst [vmem:[%s461 + $0x30] sm:%s453] %v486
                %v488 = vld [vmem:[%s460 + $0x54] sm:%s453]
                %489 = vst [vmem:[%s461 + $0x34] sm:%s453] %v488
                %v490 = vld [vmem:[%s460 + $0x58] sm:%s453]
                %491 = vst [vmem:[%s461 + $0x38] sm:%s453] %v490
                %v492 = vld [vmem:[%s460 + $0x5c] sm:%s453]
                %493 = vst [vmem:[%s461 + $0x3c] sm:%s453] %v492
                %v494 = vld [vmem:[%s460 + $0x80] sm:%s453]
                %495 = vst [vmem:[%s461 + $0x40] sm:%s453] %v494
                %v496 = vld [vmem:[%s460 + $0x84] sm:%s453]
                %497 = vst [vmem:[%s461 + $0x44] sm:%s453] %v496
                %v498 = vld [vmem:[%s460 + $0x88] sm:%s453]
                %499 = vst [vmem:[%s461 + $0x48] sm:%s453] %v498
                %v500 = vld [vmem:[%s460 + $0x8c] sm:%s453]
                %501 = vst [vmem:[%s461 + $0x4c] sm:%s453] %v500
                %v502 = vld [vmem:[%s460 + $0x90] sm:%s453]
                %503 = vst [vmem:[%s461 + $0x50] sm:%s453] %v502
                %v504 = vld [vmem:[%s460 + $0x94] sm:%s453]
                %505 = vst [vmem:[%s461 + $0x54] sm:%s453] %v504
                %v506 = vld [vmem:[%s460 + $0x98] sm:%s453]
                %507 = vst [vmem:[%s461 + $0x58] sm:%s453] %v506
                %v508 = vld [vmem:[%s460 + $0x9c] sm:%s453]
                %509 = vst [vmem:[%s461 + $0x5c] sm:%s453] %v508
                %v510 = vld [vmem:[%s460 + $0xc0] sm:%s453]
                %511 = vst [vmem:[%s461 + $0x60] sm:%s453] %v510
                %v512 = vld [vmem:[%s460 + $0xc4] sm:%s453]
                %513 = vst [vmem:[%s461 + $0x64] sm:%s453] %v512
                %v514 = vld [vmem:[%s460 + $0xc8] sm:%s453]
                %515 = vst [vmem:[%s461 + $0x68] sm:%s453] %v514
                %v516 = vld [vmem:[%s460 + $0xcc] sm:%s453]
                %517 = vst [vmem:[%s461 + $0x6c] sm:%s453] %v516
                %v518 = vld [vmem:[%s460 + $0xd0] sm:%s453]
                %519 = vst [vmem:[%s461 + $0x70] sm:%s453] %v518
                %v520 = vld [vmem:[%s460 + $0xd4] sm:%s453]
                %521 = vst [vmem:[%s461 + $0x74] sm:%s453] %v520
                %v522 = vld [vmem:[%s460 + $0xd8] sm:%s453]
                %523 = vst [vmem:[%s461 + $0x78] sm:%s453] %v522
                %v524 = vld [vmem:[%s460 + $0xdc] sm:%s453]
                %525 = vst [vmem:[%s461 + $0x7c] sm:%s453] %v524
                %v526 = vld [vmem:[%s460 + $0x100] sm:%s453]
                %527 = vst [vmem:[%s461 + $0x80] sm:%s453] %v526
                %v528 = vld [vmem:[%s460 + $0x104] sm:%s453]
                %529 = vst [vmem:[%s461 + $0x84] sm:%s453] %v528
                %v530 = vld [vmem:[%s460 + $0x108] sm:%s453]
                %531 = vst [vmem:[%s461 + $0x88] sm:%s453] %v530
                %v532 = vld [vmem:[%s460 + $0x10c] sm:%s453]
                %533 = vst [vmem:[%s461 + $0x8c] sm:%s453] %v532
                %v534 = vld [vmem:[%s460 + $0x110] sm:%s453]
                %535 = vst [vmem:[%s461 + $0x90] sm:%s453] %v534
                %v536 = vld [vmem:[%s460 + $0x114] sm:%s453]
                %537 = vst [vmem:[%s461 + $0x94] sm:%s453] %v536
                %v538 = vld [vmem:[%s460 + $0x118] sm:%s453]
                %539 = vst [vmem:[%s461 + $0x98] sm:%s453] %v538
                %v540 = vld [vmem:[%s460 + $0x11c] sm:%s453]
                %541 = vst [vmem:[%s461 + $0x9c] sm:%s453] %v540
                %v542 = vld [vmem:[%s460 + $0x140] sm:%s453]
                %543 = vst [vmem:[%s461 + $0xa0] sm:%s453] %v542
                %v544 = vld [vmem:[%s460 + $0x144] sm:%s453]
                %545 = vst [vmem:[%s461 + $0xa4] sm:%s453] %v544
                %v546 = vld [vmem:[%s460 + $0x148] sm:%s453]
                %547 = vst [vmem:[%s461 + $0xa8] sm:%s453] %v546
                %v548 = vld [vmem:[%s460 + $0x14c] sm:%s453]
                %549 = vst [vmem:[%s461 + $0xac] sm:%s453] %v548
                %v550 = vld [vmem:[%s460 + $0x150] sm:%s453]
                %551 = vst [vmem:[%s461 + $0xb0] sm:%s453] %v550
                %v552 = vld [vmem:[%s460 + $0x154] sm:%s453]
                %553 = vst [vmem:[%s461 + $0xb4] sm:%s453] %v552
                %v554 = vld [vmem:[%s460 + $0x158] sm:%s453]
                %555 = vst [vmem:[%s461 + $0xb8] sm:%s453] %v554
                %v556 = vld [vmem:[%s460 + $0x15c] sm:%s453]
                %557 = vst [vmem:[%s461 + $0xbc] sm:%s453] %v556
                %v558 = vld [vmem:[%s460 + $0x180] sm:%s453]
                %559 = vst [vmem:[%s461 + $0xc0] sm:%s453] %v558
                %v560 = vld [vmem:[%s460 + $0x184] sm:%s453]
                %561 = vst [vmem:[%s461 + $0xc4] sm:%s453] %v560
                %v562 = vld [vmem:[%s460 + $0x188] sm:%s453]
                %563 = vst [vmem:[%s461 + $0xc8] sm:%s453] %v562
                %v564 = vld [vmem:[%s460 + $0x18c] sm:%s453]
                %565 = vst [vmem:[%s461 + $0xcc] sm:%s453] %v564
                %v566 = vld [vmem:[%s460 + $0x190] sm:%s453]
                %567 = vst [vmem:[%s461 + $0xd0] sm:%s453] %v566
                %v568 = vld [vmem:[%s460 + $0x194] sm:%s453]
                %569 = vst [vmem:[%s461 + $0xd4] sm:%s453] %v568
                %v570 = vld [vmem:[%s460 + $0x198] sm:%s453]
                %571 = vst [vmem:[%s461 + $0xd8] sm:%s453] %v570
                %v572 = vld [vmem:[%s460 + $0x19c] sm:%s453]
                %573 = vst [vmem:[%s461 + $0xdc] sm:%s453] %v572
                %v574 = vld [vmem:[%s460 + $0x1c0] sm:%s453]
                %575 = vst [vmem:[%s461 + $0xe0] sm:%s453] %v574
                %v576 = vld [vmem:[%s460 + $0x1c4] sm:%s453]
                %577 = vst [vmem:[%s461 + $0xe4] sm:%s453] %v576
                %v578 = vld [vmem:[%s460 + $0x1c8] sm:%s453]
                %579 = vst [vmem:[%s461 + $0xe8] sm:%s453] %v578
                %v580 = vld [vmem:[%s460 + $0x1cc] sm:%s453]
                %581 = vst [vmem:[%s461 + $0xec] sm:%s453] %v580
                %v582 = vld [vmem:[%s460 + $0x1d0] sm:%s453]
                %583 = vst [vmem:[%s461 + $0xf0] sm:%s453] %v582
                %v584 = vld [vmem:[%s460 + $0x1d4] sm:%s453]
                %585 = vst [vmem:[%s461 + $0xf4] sm:%s453] %v584
                %v586 = vld [vmem:[%s460 + $0x1d8] sm:%s453]
                %587 = vst [vmem:[%s461 + $0xf8] sm:%s453] %v586
                %v588 = vld [vmem:[%s460 + $0x1dc] sm:%s453]
                %589 = vst [vmem:[%s461 + $0xfc] sm:%s453] %v588
              $region79: #{box_loss_forward.1} parent=73 // loop_footer
                %s459 = sadd.s32 1, %s455
              $region80: #{box_loss_forward.1} parent=73 // loop_footer_branch
                %454 = sbr.rel target = $region76
              $region81: #{box_loss_forward.1} parent=73 // loop_exit
                _
            $region74: #{box_loss_forward.1} parent=65 // pred_fallthru
              _
          $region66: #{box_loss_forward.1} parent=61 // pred_fallthru
            _
          %738 = vnop
        $region62: #{box_loss_forward.1} parent=15 // pred_fallthru
          _
      $region16: #{box_loss_forward.1} parent=5 // pred_fallthru
        _
      %p739 = scmp.le.s32.totalorder 1, %s9
      %p740 = scmp.lt.s32.totalorder %s9, 3
      %p741 = pnand %p739, %p740
      %p742 = pneg %p741
      // Predicated region
      $region100: #{box_loss_forward.1} parent=5 // pred_check
        _
      $region101: #{box_loss_forward.1} parent=5 // pred_check_branch
        %744 = sbr.rel (%p741) target = $region103
      $region102: #{box_loss_forward.1} parent=5 // pred_region
        %s745 = ssub.s32 %s9, 1
        %s746 = sand.u32 %s22, 1
        %s747 = sand.u32 %s22, 1
        %s748 = smul.addr %s747, 512
        %s749 = scalar_lea.vmem [#allocation2], %s748
        // Predicated region
        $region104: #{box_loss_forward.1} parent=102 // pred_check
          %p750 = pneg %p35
        $region105: #{box_loss_forward.1} parent=102 // pred_check_branch
          %752 = sbr.rel (%p750) target = $region107
        $region106: #{box_loss_forward.1} parent=102 // pred_region
          _
        $region107: #{box_loss_forward.1} parent=102 // pred_fallthru
          _
        %s753 = sand.u32 %s74, 1
        %s754 = sand.u32 %s74, 1
        %s755 = smul.addr %s754, 256
        %s756 = scalar_lea.vmem [#allocation3], %s755
        // Predicated region
        $region108: #{box_loss_forward.1} parent=102 // pred_check
          %p757 = pneg %p87
        $region109: #{box_loss_forward.1} parent=102 // pred_check_branch
          %759 = sbr.rel (%p757) target = $region111
        $region110: #{box_loss_forward.1} parent=102 // pred_region
          _
        $region111: #{box_loss_forward.1} parent=102 // pred_fallthru
          _
        %s760 = sand.u32 %s22, 1
        %s761 = sand.u32 %s22, 1
        %s762 = smul.addr %s761, 512
        %s763 = scalar_lea.vmem [#allocation2], %s762
        %p764 = pneg %p35
        %p765 = pneg %p32
        %s766 = smul.u32 2, %s14
        %p767 = scmp.lt.s32.totalorder %s766, 3
        %s768 = scalar_select %p767, %s766, 3
        %s769 = smul.addr %s768, 8
        %s770 = scalar_lea.vmem %s1, %s769
        %p771 = pneg %p61
        %p772 = pneg %p58
        %s773 = sand.u32 %s74, 1
        %s774 = sand.u32 %s74, 1
        %s775 = smul.addr %s774, 256
        %s776 = scalar_lea.vmem [#allocation3], %s775
        %p777 = pneg %p87
        %p778 = pneg %p84
        %p779 = pneg %p113
        %p780 = pneg %p110
        %p781 = scmp.lt.s32.totalorder %s14, 1
        %s782 = scalar_select %p781, %s14, 1
        %s783 = smul.addr %s782, 8
        %s784 = scalar_lea.vmem %s3, %s783
        %s785 = smul.u32 8, %s14
        %s786 = smul.u32 2, %s14
        %p787 = scmp.lt.s32.totalorder %s786, 3
        %s788 = scalar_select %p787, %s786, 3
        %s789 = smul.addr %s788, 8
        %s790 = scalar_lea.vmem %s1, %s789
        %s791 = smul.u32 2, %s14
        %s792 = smul.u32 8, %s14
        %p793 = scmp.lt.s32.totalorder %s14, 1
        %s794 = scalar_select %p793, %s14, 1
        %s795 = smul.addr %s794, 8
        %s796 = scalar_lea.vmem %s3, %s795
        %v797 = vld [vmem:[%s749] sm:$0xff]
        %v798 = vld [vmem:[%s749 + $0x8] sm:$0xff]
        %v799 = vld [vmem:[%s749 + $0x10] sm:$0xff]
        %v800 = vld [vmem:[%s749 + $0x18] sm:$0xff]
        %v801 = vld [vmem:[%s749 + $0x20] sm:$0xff]
        %v802 = vld [vmem:[%s749 + $0x28] sm:$0xff]
        %v803 = vld [vmem:[%s749 + $0x30] sm:$0xff]
        %v804 = vld [vmem:[%s749 + $0x38] sm:$0xff]
        %s805 = scalar_lea.vmem %s749, 64 [#allocation2]
        %v806 = vld [vmem:[%s805] sm:$0xff]
        %v807 = vld [vmem:[%s805 + $0x8] sm:$0xff]
        %v808 = vld [vmem:[%s805 + $0x10] sm:$0xff]
        %v809 = vld [vmem:[%s805 + $0x18] sm:$0xff]
        %v810 = vld [vmem:[%s805 + $0x20] sm:$0xff]
        %v811 = vld [vmem:[%s805 + $0x28] sm:$0xff]
        %v812 = vld [vmem:[%s805 + $0x30] sm:$0xff]
        %v813 = vld [vmem:[%s805 + $0x38] sm:$0xff]
        %s814 = scalar_lea.vmem %s749, 128 [#allocation2]
        %v815 = vld [vmem:[%s814] sm:$0xff]
        %v816 = vld [vmem:[%s814 + $0x8] sm:$0xff]
        %v817 = vld [vmem:[%s814 + $0x10] sm:$0xff]
        %v818 = vld [vmem:[%s814 + $0x18] sm:$0xff]
        %v819 = vld [vmem:[%s814 + $0x20] sm:$0xff]
        %v820 = vld [vmem:[%s814 + $0x28] sm:$0xff]
        %v821 = vld [vmem:[%s814 + $0x30] sm:$0xff]
        %v822 = vld [vmem:[%s814 + $0x38] sm:$0xff]
        %s823 = scalar_lea.vmem %s749, 192 [#allocation2]
        %v824 = vld [vmem:[%s823] sm:$0xff]
        %v825 = vld [vmem:[%s823 + $0x8] sm:$0xff]
        %v826 = vld [vmem:[%s823 + $0x10] sm:$0xff]
        %v827 = vld [vmem:[%s823 + $0x18] sm:$0xff]
        %v828 = vld [vmem:[%s823 + $0x20] sm:$0xff]
        %v829 = vld [vmem:[%s823 + $0x28] sm:$0xff]
        %v830 = vld [vmem:[%s823 + $0x30] sm:$0xff]
        %v831 = vld [vmem:[%s823 + $0x38] sm:$0xff]
        %s832 = scalar_lea.vmem %s749, 256 [#allocation2]
        %v833 = vld [vmem:[%s832] sm:$0xff]
        %v834 = vld [vmem:[%s832 + $0x8] sm:$0xff]
        %v835 = vld [vmem:[%s832 + $0x10] sm:$0xff]
        %v836 = vld [vmem:[%s832 + $0x18] sm:$0xff]
        %v837 = vld [vmem:[%s832 + $0x20] sm:$0xff]
        %v838 = vld [vmem:[%s832 + $0x28] sm:$0xff]
        %v839 = vld [vmem:[%s832 + $0x30] sm:$0xff]
        %v840 = vld [vmem:[%s832 + $0x38] sm:$0xff]
        %s841 = scalar_lea.vmem %s749, 320 [#allocation2]
        %v842 = vld [vmem:[%s841] sm:$0xff]
        %v843 = vld [vmem:[%s841 + $0x8] sm:$0xff]
        %v844 = vld [vmem:[%s841 + $0x10] sm:$0xff]
        %v845 = vld [vmem:[%s841 + $0x18] sm:$0xff]
        %v846 = vld [vmem:[%s841 + $0x20] sm:$0xff]
        %v847 = vld [vmem:[%s841 + $0x28] sm:$0xff]
        %v848 = vld [vmem:[%s841 + $0x30] sm:$0xff]
        %v849 = vld [vmem:[%s841 + $0x38] sm:$0xff]
        %s850 = scalar_lea.vmem %s749, 384 [#allocation2]
        %v851 = vld [vmem:[%s850] sm:$0xff]
        %v852 = vld [vmem:[%s850 + $0x8] sm:$0xff]
        %v853 = vld [vmem:[%s850 + $0x10] sm:$0xff]
        %v854 = vld [vmem:[%s850 + $0x18] sm:$0xff]
        %v855 = vld [vmem:[%s850 + $0x20] sm:$0xff]
        %v856 = vld [vmem:[%s850 + $0x28] sm:$0xff]
        %v857 = vld [vmem:[%s850 + $0x30] sm:$0xff]
        %v858 = vld [vmem:[%s850 + $0x38] sm:$0xff]
        %s859 = scalar_lea.vmem %s749, 448 [#allocation2]
        %v860 = vld [vmem:[%s859] sm:$0xff]
        %v861 = vld [vmem:[%s859 + $0x8] sm:$0xff]
        %v862 = vld [vmem:[%s859 + $0x10] sm:$0xff]
        %v863 = vld [vmem:[%s859 + $0x18] sm:$0xff]
        %v864 = vld [vmem:[%s859 + $0x20] sm:$0xff]
        %v865 = vld [vmem:[%s859 + $0x28] sm:$0xff]
        %v866 = vld [vmem:[%s859 + $0x30] sm:$0xff]
        %v867 = vld [vmem:[%s859 + $0x38] sm:$0xff]
        %v868 = vld [vmem:[%s790] sm:$0xff]
        %v869 = vld [vmem:[%s790 + $0x8] sm:$0xff]
        %v870 = vunpack.c.0.s8 %v868
        %v871 = vunpack.c.1.s8 %v868
        %v872 = vunpack.c.2.s8 %v868
        %v873 = vunpack.c.3.s8 %v868
        %v874 = vunpack.c.0.s8 %v869
        %v875 = vunpack.c.1.s8 %v869
        %v876 = vunpack.c.2.s8 %v869
        %v877 = vunpack.c.3.s8 %v869
        %vm878 = vcmp.ne.s32.totalorder %v870, 0
        %vm879 = vcmp.ne.s32.totalorder %v871, 0
        %vm880 = vcmp.ne.s32.totalorder %v872, 0
        %vm881 = vcmp.ne.s32.totalorder %v873, 0
        %vm882 = vcmp.ne.s32.totalorder %v874, 0
        %vm883 = vcmp.ne.s32.totalorder %v875, 0
        %vm884 = vcmp.ne.s32.totalorder %v876, 0
        %vm885 = vcmp.ne.s32.totalorder %v877, 0
        %v886 = vsel %vm878, 1, 0
        %v887 = vsel %vm879, 1, 0
        %v888 = vsel %vm880, 1, 0
        %v889 = vsel %vm881, 1, 0
        %v890 = vsel %vm882, 1, 0
        %v891 = vsel %vm883, 1, 0
        %v892 = vsel %vm884, 1, 0
        %v893 = vsel %vm885, 1, 0
        %v894 = vcvt.s32.f32 %v886
        %v895 = vcvt.s32.f32 %v887
        %v896 = vcvt.s32.f32 %v888
        %v897 = vcvt.s32.f32 %v889
        %v898 = vcvt.s32.f32 %v890
        %v899 = vcvt.s32.f32 %v891
        %v900 = vcvt.s32.f32 %v892
        %v901 = vcvt.s32.f32 %v893
        %v902 = vsub.f32 %v797, %v833
        %v903 = vsub.f32 %v798, %v834
        %v904 = vsub.f32 %v799, %v835
        %v905 = vsub.f32 %v800, %v836
        %v906 = vsub.f32 %v801, %v837
        %v907 = vsub.f32 %v802, %v838
        %v908 = vsub.f32 %v803, %v839
        %v909 = vsub.f32 %v804, %v840
        %v910 = vand.u32 2147483647, %v902
        %v911 = vand.u32 2147483647, %v903
        %v912 = vand.u32 2147483647, %v904
        %v913 = vand.u32 2147483647, %v905
        %v914 = vand.u32 2147483647, %v906
        %v915 = vand.u32 2147483647, %v907
        %v916 = vand.u32 2147483647, %v908
        %v917 = vand.u32 2147483647, %v909
        %v918 = vsub.f32 %v806, %v842
        %v919 = vsub.f32 %v807, %v843
        %v920 = vsub.f32 %v808, %v844
        %v921 = vsub.f32 %v809, %v845
        %v922 = vsub.f32 %v810, %v846
        %v923 = vsub.f32 %v811, %v847
        %v924 = vsub.f32 %v812, %v848
        %v925 = vsub.f32 %v813, %v849
        %v926 = vand.u32 2147483647, %v918
        %v927 = vand.u32 2147483647, %v919
        %v928 = vand.u32 2147483647, %v920
        %v929 = vand.u32 2147483647, %v921
        %v930 = vand.u32 2147483647, %v922
        %v931 = vand.u32 2147483647, %v923
        %v932 = vand.u32 2147483647, %v924
        %v933 = vand.u32 2147483647, %v925
        %v934 = vadd.f32 %v910, %v926
        %v935 = vadd.f32 %v911, %v927
        %v936 = vadd.f32 %v912, %v928
        %v937 = vadd.f32 %v913, %v929
        %v938 = vadd.f32 %v914, %v930
        %v939 = vadd.f32 %v915, %v931
        %v940 = vadd.f32 %v916, %v932
        %v941 = vadd.f32 %v917, %v933
        %v942 = vsub.f32 %v815, %v851
        %v943 = vsub.f32 %v816, %v852
        %v944 = vsub.f32 %v817, %v853
        %v945 = vsub.f32 %v818, %v854
        %v946 = vsub.f32 %v819, %v855
        %v947 = vsub.f32 %v820, %v856
        %v948 = vsub.f32 %v821, %v857
        %v949 = vsub.f32 %v822, %v858
        %v950 = vand.u32 2147483647, %v942
        %v951 = vand.u32 2147483647, %v943
        %v952 = vand.u32 2147483647, %v944
        %v953 = vand.u32 2147483647, %v945
        %v954 = vand.u32 2147483647, %v946
        %v955 = vand.u32 2147483647, %v947
        %v956 = vand.u32 2147483647, %v948
        %v957 = vand.u32 2147483647, %v949
        %v958 = vadd.f32 %v934, %v950
        %v959 = vadd.f32 %v935, %v951
        %v960 = vadd.f32 %v936, %v952
        %v961 = vadd.f32 %v937, %v953
        %v962 = vadd.f32 %v938, %v954
        %v963 = vadd.f32 %v939, %v955
        %v964 = vadd.f32 %v940, %v956
        %v965 = vadd.f32 %v941, %v957
        %v966 = vsub.f32 %v824, %v860
        %v967 = vsub.f32 %v825, %v861
        %v968 = vsub.f32 %v826, %v862
        %v969 = vsub.f32 %v827, %v863
        %v970 = vsub.f32 %v828, %v864
        %v971 = vsub.f32 %v829, %v865
        %v972 = vsub.f32 %v830, %v866
        %v973 = vsub.f32 %v831, %v867
        %v974 = vand.u32 2147483647, %v966
        %v975 = vand.u32 2147483647, %v967
        %v976 = vand.u32 2147483647, %v968
        %v977 = vand.u32 2147483647, %v969
        %v978 = vand.u32 2147483647, %v970
        %v979 = vand.u32 2147483647, %v971
        %v980 = vand.u32 2147483647, %v972
        %v981 = vand.u32 2147483647, %v973
        %v982 = vadd.f32 %v958, %v974
        %v983 = vadd.f32 %v959, %v975
        %v984 = vadd.f32 %v960, %v976
        %v985 = vadd.f32 %v961, %v977
        %v986 = vadd.f32 %v962, %v978
        %v987 = vadd.f32 %v963, %v979
        %v988 = vadd.f32 %v964, %v980
        %v989 = vadd.f32 %v965, %v981
        %v990 = vmul.f32 %v815, 0.5
        %v991 = vmul.f32 %v816, 0.5
        %v992 = vmul.f32 %v817, 0.5
        %v993 = vmul.f32 %v818, 0.5
        %v994 = vmul.f32 %v819, 0.5
        %v995 = vmul.f32 %v820, 0.5
        %v996 = vmul.f32 %v821, 0.5
        %v997 = vmul.f32 %v822, 0.5
        %v998 = vsub.f32 %v797, %v990
        %v999 = vsub.f32 %v798, %v991
        %v1000 = vsub.f32 %v799, %v992
        %v1001 = vsub.f32 %v800, %v993
        %v1002 = vsub.f32 %v801, %v994
        %v1003 = vsub.f32 %v802, %v995
        %v1004 = vsub.f32 %v803, %v996
        %v1005 = vsub.f32 %v804, %v997
        %v1006 = vadd.f32 %v797, %v990
        %v1007 = vadd.f32 %v798, %v991
        %v1008 = vadd.f32 %v799, %v992
        %v1009 = vadd.f32 %v800, %v993
        %v1010 = vadd.f32 %v801, %v994
        %v1011 = vadd.f32 %v802, %v995
        %v1012 = vadd.f32 %v803, %v996
        %v1013 = vadd.f32 %v804, %v997
        %v1014 = vmul.f32 %v824, 0.5
        %v1015 = vmul.f32 %v825, 0.5
        %v1016 = vmul.f32 %v826, 0.5
        %v1017 = vmul.f32 %v827, 0.5
        %v1018 = vmul.f32 %v828, 0.5
        %v1019 = vmul.f32 %v829, 0.5
        %v1020 = vmul.f32 %v830, 0.5
        %v1021 = vmul.f32 %v831, 0.5
        %v1022 = vsub.f32 %v806, %v1014
        %v1023 = vsub.f32 %v807, %v1015
        %v1024 = vsub.f32 %v808, %v1016
        %v1025 = vsub.f32 %v809, %v1017
        %v1026 = vsub.f32 %v810, %v1018
        %v1027 = vsub.f32 %v811, %v1019
        %v1028 = vsub.f32 %v812, %v1020
        %v1029 = vsub.f32 %v813, %v1021
        %v1030 = vadd.f32 %v806, %v1014
        %v1031 = vadd.f32 %v807, %v1015
        %v1032 = vadd.f32 %v808, %v1016
        %v1033 = vadd.f32 %v809, %v1017
        %v1034 = vadd.f32 %v810, %v1018
        %v1035 = vadd.f32 %v811, %v1019
        %v1036 = vadd.f32 %v812, %v1020
        %v1037 = vadd.f32 %v813, %v1021
        %v1038 = vmul.f32 %v851, 0.5
        %v1039 = vmul.f32 %v852, 0.5
        %v1040 = vmul.f32 %v853, 0.5
        %v1041 = vmul.f32 %v854, 0.5
        %v1042 = vmul.f32 %v855, 0.5
        %v1043 = vmul.f32 %v856, 0.5
        %v1044 = vmul.f32 %v857, 0.5
        %v1045 = vmul.f32 %v858, 0.5
        %v1046 = vsub.f32 %v833, %v1038
        %v1047 = vsub.f32 %v834, %v1039
        %v1048 = vsub.f32 %v835, %v1040
        %v1049 = vsub.f32 %v836, %v1041
        %v1050 = vsub.f32 %v837, %v1042
        %v1051 = vsub.f32 %v838, %v1043
        %v1052 = vsub.f32 %v839, %v1044
        %v1053 = vsub.f32 %v840, %v1045
        %v1054 = vadd.f32 %v833, %v1038
        %v1055 = vadd.f32 %v834, %v1039
        %v1056 = vadd.f32 %v835, %v1040
        %v1057 = vadd.f32 %v836, %v1041
        %v1058 = vadd.f32 %v837, %v1042
        %v1059 = vadd.f32 %v838, %v1043
        %v1060 = vadd.f32 %v839, %v1044
        %v1061 = vadd.f32 %v840, %v1045
        %v1062 = vmul.f32 %v860, 0.5
        %v1063 = vmul.f32 %v861, 0.5
        %v1064 = vmul.f32 %v862, 0.5
        %v1065 = vmul.f32 %v863, 0.5
        %v1066 = vmul.f32 %v864, 0.5
        %v1067 = vmul.f32 %v865, 0.5
        %v1068 = vmul.f32 %v866, 0.5
        %v1069 = vmul.f32 %v867, 0.5
        %v1070 = vsub.f32 %v842, %v1062
        %v1071 = vsub.f32 %v843, %v1063
        %v1072 = vsub.f32 %v844, %v1064
        %v1073 = vsub.f32 %v845, %v1065
        %v1074 = vsub.f32 %v846, %v1066
        %v1075 = vsub.f32 %v847, %v1067
        %v1076 = vsub.f32 %v848, %v1068
        %v1077 = vsub.f32 %v849, %v1069
        %v1078 = vadd.f32 %v842, %v1062
        %v1079 = vadd.f32 %v843, %v1063
        %v1080 = vadd.f32 %v844, %v1064
        %v1081 = vadd.f32 %v845, %v1065
        %v1082 = vadd.f32 %v846, %v1066
        %v1083 = vadd.f32 %v847, %v1067
        %v1084 = vadd.f32 %v848, %v1068
        %v1085 = vadd.f32 %v849, %v1069
        %v1086 = vmin.f32 %v1006, %v1054
        %v1087 = vmin.f32 %v1007, %v1055
        %v1088 = vmin.f32 %v1008, %v1056
        %v1089 = vmin.f32 %v1009, %v1057
        %v1090 = vmin.f32 %v1010, %v1058
        %v1091 = vmin.f32 %v1011, %v1059
        %v1092 = vmin.f32 %v1012, %v1060
        %v1093 = vmin.f32 %v1013, %v1061
        %v1094 = vmax.f32 %v998, %v1046
        %v1095 = vmax.f32 %v999, %v1047
        %v1096 = vmax.f32 %v1000, %v1048
        %v1097 = vmax.f32 %v1001, %v1049
        %v1098 = vmax.f32 %v1002, %v1050
        %v1099 = vmax.f32 %v1003, %v1051
        %v1100 = vmax.f32 %v1004, %v1052
        %v1101 = vmax.f32 %v1005, %v1053
        %v1102 = vsub.f32 %v1086, %v1094
        %v1103 = vsub.f32 %v1087, %v1095
        %v1104 = vsub.f32 %v1088, %v1096
        %v1105 = vsub.f32 %v1089, %v1097
        %v1106 = vsub.f32 %v1090, %v1098
        %v1107 = vsub.f32 %v1091, %v1099
        %v1108 = vsub.f32 %v1092, %v1100
        %v1109 = vsub.f32 %v1093, %v1101
        %v1110 = vmax.f32 %v1102, 0.0
        %v1111 = vmax.f32 %v1103, 0.0
        %v1112 = vmax.f32 %v1104, 0.0
        %v1113 = vmax.f32 %v1105, 0.0
        %v1114 = vmax.f32 %v1106, 0.0
        %v1115 = vmax.f32 %v1107, 0.0
        %v1116 = vmax.f32 %v1108, 0.0
        %v1117 = vmax.f32 %v1109, 0.0
        %v1118 = vmin.f32 %v1030, %v1078
        %v1119 = vmin.f32 %v1031, %v1079
        %v1120 = vmin.f32 %v1032, %v1080
        %v1121 = vmin.f32 %v1033, %v1081
        %v1122 = vmin.f32 %v1034, %v1082
        %v1123 = vmin.f32 %v1035, %v1083
        %v1124 = vmin.f32 %v1036, %v1084
        %v1125 = vmin.f32 %v1037, %v1085
        %v1126 = vmax.f32 %v1022, %v1070
        %v1127 = vmax.f32 %v1023, %v1071
        %v1128 = vmax.f32 %v1024, %v1072
        %v1129 = vmax.f32 %v1025, %v1073
        %v1130 = vmax.f32 %v1026, %v1074
        %v1131 = vmax.f32 %v1027, %v1075
        %v1132 = vmax.f32 %v1028, %v1076
        %v1133 = vmax.f32 %v1029, %v1077
        %v1134 = vsub.f32 %v1118, %v1126
        %v1135 = vsub.f32 %v1119, %v1127
        %v1136 = vsub.f32 %v1120, %v1128
        %v1137 = vsub.f32 %v1121, %v1129
        %v1138 = vsub.f32 %v1122, %v1130
        %v1139 = vsub.f32 %v1123, %v1131
        %v1140 = vsub.f32 %v1124, %v1132
        %v1141 = vsub.f32 %v1125, %v1133
        %v1142 = vmax.f32 %v1134, 0.0
        %v1143 = vmax.f32 %v1135, 0.0
        %v1144 = vmax.f32 %v1136, 0.0
        %v1145 = vmax.f32 %v1137, 0.0
        %v1146 = vmax.f32 %v1138, 0.0
        %v1147 = vmax.f32 %v1139, 0.0
        %v1148 = vmax.f32 %v1140, 0.0
        %v1149 = vmax.f32 %v1141, 0.0
        %v1150 = vmul.f32 %v1110, %v1142
        %v1151 = vmul.f32 %v1111, %v1143
        %v1152 = vmul.f32 %v1112, %v1144
        %v1153 = vmul.f32 %v1113, %v1145
        %v1154 = vmul.f32 %v1114, %v1146
        %v1155 = vmul.f32 %v1115, %v1147
        %v1156 = vmul.f32 %v1116, %v1148
        %v1157 = vmul.f32 %v1117, %v1149
        %v1158 = vmul.f32 %v815, %v824
        %v1159 = vmul.f32 %v816, %v825
        %v1160 = vmul.f32 %v817, %v826
        %v1161 = vmul.f32 %v818, %v827
        %v1162 = vmul.f32 %v819, %v828
        %v1163 = vmul.f32 %v820, %v829
        %v1164 = vmul.f32 %v821, %v830
        %v1165 = vmul.f32 %v822, %v831
        %v1166 = vmul.f32 %v851, %v860
        %v1167 = vmul.f32 %v852, %v861
        %v1168 = vmul.f32 %v853, %v862
        %v1169 = vmul.f32 %v854, %v863
        %v1170 = vmul.f32 %v855, %v864
        %v1171 = vmul.f32 %v856, %v865
        %v1172 = vmul.f32 %v857, %v866
        %v1173 = vmul.f32 %v858, %v867
        %v1174 = vadd.f32 %v1158, %v1166
        %v1175 = vadd.f32 %v1159, %v1167
        %v1176 = vadd.f32 %v1160, %v1168
        %v1177 = vadd.f32 %v1161, %v1169
        %v1178 = vadd.f32 %v1162, %v1170
        %v1179 = vadd.f32 %v1163, %v1171
        %v1180 = vadd.f32 %v1164, %v1172
        %v1181 = vadd.f32 %v1165, %v1173
        %v1182 = vsub.f32 %v1174, %v1150
        %v1183 = vsub.f32 %v1175, %v1151
        %v1184 = vsub.f32 %v1176, %v1152
        %v1185 = vsub.f32 %v1177, %v1153
        %v1186 = vsub.f32 %v1178, %v1154
        %v1187 = vsub.f32 %v1179, %v1155
        %v1188 = vsub.f32 %v1180, %v1156
        %v1189 = vsub.f32 %v1181, %v1157
        %v1190 = vadd.f32 %v1182, 1e-06
        %v1191 = vadd.f32 %v1183, 1e-06
        %v1192 = vadd.f32 %v1184, 1e-06
        %v1193 = vadd.f32 %v1185, 1e-06
        %v1194 = vadd.f32 %v1186, 1e-06
        %v1195 = vadd.f32 %v1187, 1e-06
        %v1196 = vadd.f32 %v1188, 1e-06
        %v1197 = vadd.f32 %v1189, 1e-06
        %v1198 = vrcp.pop %v1190
        %v1199 = vmul.f32 %v1150, %v1198
        %v1200 = vrcp.pop %v1191
        %v1201 = vmul.f32 %v1151, %v1200
        %v1202 = vrcp.pop %v1192
        %v1203 = vmul.f32 %v1152, %v1202
        %v1204 = vrcp.pop %v1193
        %v1205 = vmul.f32 %v1153, %v1204
        %v1206 = vrcp.pop %v1194
        %v1207 = vmul.f32 %v1154, %v1206
        %v1208 = vrcp.pop %v1195
        %v1209 = vmul.f32 %v1155, %v1208
        %v1210 = vrcp.pop %v1196
        %v1211 = vmul.f32 %v1156, %v1210
        %v1212 = vrcp.pop %v1197
        %v1213 = vmul.f32 %v1157, %v1212
        %v1214 = vsub.f32 1.0, %v1199
        %v1215 = vsub.f32 1.0, %v1201
        %v1216 = vsub.f32 1.0, %v1203
        %v1217 = vsub.f32 1.0, %v1205
        %v1218 = vsub.f32 1.0, %v1207
        %v1219 = vsub.f32 1.0, %v1209
        %v1220 = vsub.f32 1.0, %v1211
        %v1221 = vsub.f32 1.0, %v1213
        %v1222 = vld [vmem:[%s756] sm:$0xf]
        %v1223 = vld [vmem:[%s756 + $0x4] sm:$0xf]
        %v1224 = vld [vmem:[%s756 + $0x8] sm:$0xf]
        %v1225 = vld [vmem:[%s756 + $0xc] sm:$0xf]
        %v1226 = vld [vmem:[%s756 + $0x10] sm:$0xf]
        %v1227 = vld [vmem:[%s756 + $0x14] sm:$0xf]
        %v1228 = vld [vmem:[%s756 + $0x18] sm:$0xf]
        %v1229 = vld [vmem:[%s756 + $0x1c] sm:$0xf]
        %v1230 = vunpack.c.l.bf16 %v1222
        %v1231 = vunpack.c.l.bf16 %v1223
        %v1232 = vunpack.c.l.bf16 %v1224
        %v1233 = vunpack.c.l.bf16 %v1225
        %v1234 = vunpack.c.l.bf16 %v1226
        %v1235 = vunpack.c.l.bf16 %v1227
        %v1236 = vunpack.c.l.bf16 %v1228
        %v1237 = vunpack.c.l.bf16 %v1229
        %s1238 = scalar_lea.vmem %s756, 32 [#allocation3]
        %v1239 = vld [vmem:[%s1238] sm:$0xf]
        %v1240 = vld [vmem:[%s1238 + $0x4] sm:$0xf]
        %v1241 = vld [vmem:[%s1238 + $0x8] sm:$0xf]
        %v1242 = vld [vmem:[%s1238 + $0xc] sm:$0xf]
        %v1243 = vld [vmem:[%s1238 + $0x10] sm:$0xf]
        %v1244 = vld [vmem:[%s1238 + $0x14] sm:$0xf]
        %v1245 = vld [vmem:[%s1238 + $0x18] sm:$0xf]
        %v1246 = vld [vmem:[%s1238 + $0x1c] sm:$0xf]
        %v1247 = vunpack.c.l.bf16 %v1239
        %v1248 = vunpack.c.l.bf16 %v1240
        %v1249 = vunpack.c.l.bf16 %v1241
        %v1250 = vunpack.c.l.bf16 %v1242
        %v1251 = vunpack.c.l.bf16 %v1243
        %v1252 = vunpack.c.l.bf16 %v1244
        %v1253 = vunpack.c.l.bf16 %v1245
        %v1254 = vunpack.c.l.bf16 %v1246
        %v1255 = vmax.f32 %v1230, %v1247
        %v1256 = vmax.f32 %v1231, %v1248
        %v1257 = vmax.f32 %v1232, %v1249
        %v1258 = vmax.f32 %v1233, %v1250
        %v1259 = vmax.f32 %v1234, %v1251
        %v1260 = vmax.f32 %v1235, %v1252
        %v1261 = vmax.f32 %v1236, %v1253
        %v1262 = vmax.f32 %v1237, %v1254
        %s1263 = scalar_lea.vmem %s756, 64 [#allocation3]
        %v1264 = vld [vmem:[%s1263] sm:$0xf]
        %v1265 = vld [vmem:[%s1263 + $0x4] sm:$0xf]
        %v1266 = vld [vmem:[%s1263 + $0x8] sm:$0xf]
        %v1267 = vld [vmem:[%s1263 + $0xc] sm:$0xf]
        %v1268 = vld [vmem:[%s1263 + $0x10] sm:$0xf]
        %v1269 = vld [vmem:[%s1263 + $0x14] sm:$0xf]
        %v1270 = vld [vmem:[%s1263 + $0x18] sm:$0xf]
        %v1271 = vld [vmem:[%s1263 + $0x1c] sm:$0xf]
        %v1272 = vunpack.c.l.bf16 %v1264
        %v1273 = vunpack.c.l.bf16 %v1265
        %v1274 = vunpack.c.l.bf16 %v1266
        %v1275 = vunpack.c.l.bf16 %v1267
        %v1276 = vunpack.c.l.bf16 %v1268
        %v1277 = vunpack.c.l.bf16 %v1269
        %v1278 = vunpack.c.l.bf16 %v1270
        %v1279 = vunpack.c.l.bf16 %v1271
        %v1280 = vmax.f32 %v1255, %v1272
        %v1281 = vmax.f32 %v1256, %v1273
        %v1282 = vmax.f32 %v1257, %v1274
        %v1283 = vmax.f32 %v1258, %v1275
        %v1284 = vmax.f32 %v1259, %v1276
        %v1285 = vmax.f32 %v1260, %v1277
        %v1286 = vmax.f32 %v1261, %v1278
        %v1287 = vmax.f32 %v1262, %v1279
        %s1288 = scalar_lea.vmem %s756, 96 [#allocation3]
        %v1289 = vld [vmem:[%s1288] sm:$0xf]
        %v1290 = vld [vmem:[%s1288 + $0x4] sm:$0xf]
        %v1291 = vld [vmem:[%s1288 + $0x8] sm:$0xf]
        %v1292 = vld [vmem:[%s1288 + $0xc] sm:$0xf]
        %v1293 = vld [vmem:[%s1288 + $0x10] sm:$0xf]
        %v1294 = vld [vmem:[%s1288 + $0x14] sm:$0xf]
        %v1295 = vld [vmem:[%s1288 + $0x18] sm:$0xf]
        %v1296 = vld [vmem:[%s1288 + $0x1c] sm:$0xf]
        %v1297 = vunpack.c.l.bf16 %v1289
        %v1298 = vunpack.c.l.bf16 %v1290
        %v1299 = vunpack.c.l.bf16 %v1291
        %v1300 = vunpack.c.l.bf16 %v1292
        %v1301 = vunpack.c.l.bf16 %v1293
        %v1302 = vunpack.c.l.bf16 %v1294
        %v1303 = vunpack.c.l.bf16 %v1295
        %v1304 = vunpack.c.l.bf16 %v1296
        %v1305 = vmax.f32 %v1280, %v1297
        %v1306 = vmax.f32 %v1281, %v1298
        %v1307 = vmax.f32 %v1282, %v1299
        %v1308 = vmax.f32 %v1283, %v1300
        %v1309 = vmax.f32 %v1284, %v1301
        %v1310 = vmax.f32 %v1285, %v1302
        %v1311 = vmax.f32 %v1286, %v1303
        %v1312 = vmax.f32 %v1287, %v1304
        %s1313 = scalar_lea.vmem %s756, 128 [#allocation3]
        %v1314 = vld [vmem:[%s1313] sm:$0xf]
        %v1315 = vld [vmem:[%s1313 + $0x4] sm:$0xf]
        %v1316 = vld [vmem:[%s1313 + $0x8] sm:$0xf]
        %v1317 = vld [vmem:[%s1313 + $0xc] sm:$0xf]
        %v1318 = vld [vmem:[%s1313 + $0x10] sm:$0xf]
        %v1319 = vld [vmem:[%s1313 + $0x14] sm:$0xf]
        %v1320 = vld [vmem:[%s1313 + $0x18] sm:$0xf]
        %v1321 = vld [vmem:[%s1313 + $0x1c] sm:$0xf]
        %v1322 = vunpack.c.l.bf16 %v1314
        %v1323 = vunpack.c.l.bf16 %v1315
        %v1324 = vunpack.c.l.bf16 %v1316
        %v1325 = vunpack.c.l.bf16 %v1317
        %v1326 = vunpack.c.l.bf16 %v1318
        %v1327 = vunpack.c.l.bf16 %v1319
        %v1328 = vunpack.c.l.bf16 %v1320
        %v1329 = vunpack.c.l.bf16 %v1321
        %v1330 = vmax.f32 %v1305, %v1322
        %v1331 = vmax.f32 %v1306, %v1323
        %v1332 = vmax.f32 %v1307, %v1324
        %v1333 = vmax.f32 %v1308, %v1325
        %v1334 = vmax.f32 %v1309, %v1326
        %v1335 = vmax.f32 %v1310, %v1327
        %v1336 = vmax.f32 %v1311, %v1328
        %v1337 = vmax.f32 %v1312, %v1329
        %s1338 = scalar_lea.vmem %s756, 160 [#allocation3]
        %v1339 = vld [vmem:[%s1338] sm:$0xf]
        %v1340 = vld [vmem:[%s1338 + $0x4] sm:$0xf]
        %v1341 = vld [vmem:[%s1338 + $0x8] sm:$0xf]
        %v1342 = vld [vmem:[%s1338 + $0xc] sm:$0xf]
        %v1343 = vld [vmem:[%s1338 + $0x10] sm:$0xf]
        %v1344 = vld [vmem:[%s1338 + $0x14] sm:$0xf]
        %v1345 = vld [vmem:[%s1338 + $0x18] sm:$0xf]
        %v1346 = vld [vmem:[%s1338 + $0x1c] sm:$0xf]
        %v1347 = vunpack.c.l.bf16 %v1339
        %v1348 = vunpack.c.l.bf16 %v1340
        %v1349 = vunpack.c.l.bf16 %v1341
        %v1350 = vunpack.c.l.bf16 %v1342
        %v1351 = vunpack.c.l.bf16 %v1343
        %v1352 = vunpack.c.l.bf16 %v1344
        %v1353 = vunpack.c.l.bf16 %v1345
        %v1354 = vunpack.c.l.bf16 %v1346
        %v1355 = vmax.f32 %v1330, %v1347
        %v1356 = vmax.f32 %v1331, %v1348
        %v1357 = vmax.f32 %v1332, %v1349
        %v1358 = vmax.f32 %v1333, %v1350
        %v1359 = vmax.f32 %v1334, %v1351
        %v1360 = vmax.f32 %v1335, %v1352
        %v1361 = vmax.f32 %v1336, %v1353
        %v1362 = vmax.f32 %v1337, %v1354
        %s1363 = scalar_lea.vmem %s756, 192 [#allocation3]
        %v1364 = vld [vmem:[%s1363] sm:$0xf]
        %v1365 = vld [vmem:[%s1363 + $0x4] sm:$0xf]
        %v1366 = vld [vmem:[%s1363 + $0x8] sm:$0xf]
        %v1367 = vld [vmem:[%s1363 + $0xc] sm:$0xf]
        %v1368 = vld [vmem:[%s1363 + $0x10] sm:$0xf]
        %v1369 = vld [vmem:[%s1363 + $0x14] sm:$0xf]
        %v1370 = vld [vmem:[%s1363 + $0x18] sm:$0xf]
        %v1371 = vld [vmem:[%s1363 + $0x1c] sm:$0xf]
        %v1372 = vunpack.c.l.bf16 %v1364
        %v1373 = vunpack.c.l.bf16 %v1365
        %v1374 = vunpack.c.l.bf16 %v1366
        %v1375 = vunpack.c.l.bf16 %v1367
        %v1376 = vunpack.c.l.bf16 %v1368
        %v1377 = vunpack.c.l.bf16 %v1369
        %v1378 = vunpack.c.l.bf16 %v1370
        %v1379 = vunpack.c.l.bf16 %v1371
        %v1380 = vmax.f32 %v1355, %v1372
        %v1381 = vmax.f32 %v1356, %v1373
        %v1382 = vmax.f32 %v1357, %v1374
        %v1383 = vmax.f32 %v1358, %v1375
        %v1384 = vmax.f32 %v1359, %v1376
        %v1385 = vmax.f32 %v1360, %v1377
        %v1386 = vmax.f32 %v1361, %v1378
        %v1387 = vmax.f32 %v1362, %v1379
        %s1388 = scalar_lea.vmem %s756, 224 [#allocation3]
        %v1389 = vld [vmem:[%s1388] sm:$0xf]
        %v1390 = vld [vmem:[%s1388 + $0x4] sm:$0xf]
        %v1391 = vld [vmem:[%s1388 + $0x8] sm:$0xf]
        %v1392 = vld [vmem:[%s1388 + $0xc] sm:$0xf]
        %v1393 = vld [vmem:[%s1388 + $0x10] sm:$0xf]
        %v1394 = vld [vmem:[%s1388 + $0x14] sm:$0xf]
        %v1395 = vld [vmem:[%s1388 + $0x18] sm:$0xf]
        %v1396 = vld [vmem:[%s1388 + $0x1c] sm:$0xf]
        %v1397 = vunpack.c.l.bf16 %v1389
        %v1398 = vunpack.c.l.bf16 %v1390
        %v1399 = vunpack.c.l.bf16 %v1391
        %v1400 = vunpack.c.l.bf16 %v1392
        %v1401 = vunpack.c.l.bf16 %v1393
        %v1402 = vunpack.c.l.bf16 %v1394
        %v1403 = vunpack.c.l.bf16 %v1395
        %v1404 = vunpack.c.l.bf16 %v1396
        %v1405 = vmax.f32 %v1380, %v1397
        %v1406 = vmax.f32 %v1381, %v1398
        %v1407 = vmax.f32 %v1382, %v1399
        %v1408 = vmax.f32 %v1383, %v1400
        %v1409 = vmax.f32 %v1384, %v1401
        %v1410 = vmax.f32 %v1385, %v1402
        %v1411 = vmax.f32 %v1386, %v1403
        %v1412 = vmax.f32 %v1387, %v1404
        %v1413 = vsub.f32 %v1230, %v1405
        %v1414 = vsub.f32 %v1231, %v1406
        %v1415 = vsub.f32 %v1232, %v1407
        %v1416 = vsub.f32 %v1233, %v1408
        %v1417 = vsub.f32 %v1234, %v1409
        %v1418 = vsub.f32 %v1235, %v1410
        %v1419 = vsub.f32 %v1236, %v1411
        %v1420 = vsub.f32 %v1237, %v1412
        %v1421 = vmul.f32 %v1413, 1.442695
        %v1422 = vpow.pop %v1421
        %v1423 = vmul.f32 %v1414, 1.442695
        %v1424 = vpow.pop %v1423
        %v1425 = vmul.f32 %v1415, 1.442695
        %v1426 = vpow.pop %v1425
        %v1427 = vmul.f32 %v1416, 1.442695
        %v1428 = vpow.pop %v1427
        %v1429 = vmul.f32 %v1417, 1.442695
        %v1430 = vpow.pop %v1429
        %v1431 = vmul.f32 %v1418, 1.442695
        %v1432 = vpow.pop %v1431
        %v1433 = vmul.f32 %v1419, 1.442695
        %v1434 = vpow.pop %v1433
        %v1435 = vmul.f32 %v1420, 1.442695
        %v1436 = vpow.pop %v1435
        %v1437 = vadd.f32 %v1422, 0.0
        %v1438 = vadd.f32 %v1424, 0.0
        %v1439 = vadd.f32 %v1426, 0.0
        %v1440 = vadd.f32 %v1428, 0.0
        %v1441 = vadd.f32 %v1430, 0.0
        %v1442 = vadd.f32 %v1432, 0.0
        %v1443 = vadd.f32 %v1434, 0.0
        %v1444 = vadd.f32 %v1436, 0.0
        %vm1445 = vcmp.eq.s32.totalorder %v870, 0
        %vm1446 = vcmp.eq.s32.totalorder %v871, 0
        %vm1447 = vcmp.eq.s32.totalorder %v872, 0
        %vm1448 = vcmp.eq.s32.totalorder %v873, 0
        %vm1449 = vcmp.eq.s32.totalorder %v874, 0
        %vm1450 = vcmp.eq.s32.totalorder %v875, 0
        %vm1451 = vcmp.eq.s32.totalorder %v876, 0
        %vm1452 = vcmp.eq.s32.totalorder %v877, 0
        %v1453 = vsel %vm1445, %v1230, 0.0
        %v1454 = vsel %vm1446, %v1231, 0.0
        %v1455 = vsel %vm1447, %v1232, 0.0
        %v1456 = vsel %vm1448, %v1233, 0.0
        %v1457 = vsel %vm1449, %v1234, 0.0
        %v1458 = vsel %vm1450, %v1235, 0.0
        %v1459 = vsel %vm1451, %v1236, 0.0
        %v1460 = vsel %vm1452, %v1237, 0.0
        %v1461 = vsub.f32 %v1247, %v1405
        %v1462 = vsub.f32 %v1248, %v1406
        %v1463 = vsub.f32 %v1249, %v1407
        %v1464 = vsub.f32 %v1250, %v1408
        %v1465 = vsub.f32 %v1251, %v1409
        %v1466 = vsub.f32 %v1252, %v1410
        %v1467 = vsub.f32 %v1253, %v1411
        %v1468 = vsub.f32 %v1254, %v1412
        %v1469 = vmul.f32 %v1461, 1.442695
        %v1470 = vpow.pop %v1469
        %v1471 = vmul.f32 %v1462, 1.442695
        %v1472 = vpow.pop %v1471
        %v1473 = vmul.f32 %v1463, 1.442695
        %v1474 = vpow.pop %v1473
        %v1475 = vmul.f32 %v1464, 1.442695
        %v1476 = vpow.pop %v1475
        %v1477 = vmul.f32 %v1465, 1.442695
        %v1478 = vpow.pop %v1477
        %v1479 = vmul.f32 %v1466, 1.442695
        %v1480 = vpow.pop %v1479
        %v1481 = vmul.f32 %v1467, 1.442695
        %v1482 = vpow.pop %v1481
        %v1483 = vmul.f32 %v1468, 1.442695
        %v1484 = vpow.pop %v1483
        %v1485 = vadd.f32 %v1437, %v1470
        %v1486 = vadd.f32 %v1438, %v1472
        %v1487 = vadd.f32 %v1439, %v1474
        %v1488 = vadd.f32 %v1440, %v1476
        %v1489 = vadd.f32 %v1441, %v1478
        %v1490 = vadd.f32 %v1442, %v1480
        %v1491 = vadd.f32 %v1443, %v1482
        %v1492 = vadd.f32 %v1444, %v1484
        %vm1493 = vcmp.eq.s32.totalorder %v870, 1
        %vm1494 = vcmp.eq.s32.totalorder %v871, 1
        %vm1495 = vcmp.eq.s32.totalorder %v872, 1
        %vm1496 = vcmp.eq.s32.totalorder %v873, 1
        %vm1497 = vcmp.eq.s32.totalorder %v874, 1
        %vm1498 = vcmp.eq.s32.totalorder %v875, 1
        %vm1499 = vcmp.eq.s32.totalorder %v876, 1
        %vm1500 = vcmp.eq.s32.totalorder %v877, 1
        %v1501 = vsel %vm1493, %v1247, %v1453
        %v1502 = vsel %vm1494, %v1248, %v1454
        %v1503 = vsel %vm1495, %v1249, %v1455
        %v1504 = vsel %vm1496, %v1250, %v1456
        %v1505 = vsel %vm1497, %v1251, %v1457
        %v1506 = vsel %vm1498, %v1252, %v1458
        %v1507 = vsel %vm1499, %v1253, %v1459
        %v1508 = vsel %vm1500, %v1254, %v1460
        %v1509 = vsub.f32 %v1272, %v1405
        %v1510 = vsub.f32 %v1273, %v1406
        %v1511 = vsub.f32 %v1274, %v1407
        %v1512 = vsub.f32 %v1275, %v1408
        %v1513 = vsub.f32 %v1276, %v1409
        %v1514 = vsub.f32 %v1277, %v1410
        %v1515 = vsub.f32 %v1278, %v1411
        %v1516 = vsub.f32 %v1279, %v1412
        %v1517 = vmul.f32 %v1509, 1.442695
        %v1518 = vpow.pop %v1517
        %v1519 = vmul.f32 %v1510, 1.442695
        %v1520 = vpow.pop %v1519
        %v1521 = vmul.f32 %v1511, 1.442695
        %v1522 = vpow.pop %v1521
        %v1523 = vmul.f32 %v1512, 1.442695
        %v1524 = vpow.pop %v1523
        %v1525 = vmul.f32 %v1513, 1.442695
        %v1526 = vpow.pop %v1525
        %v1527 = vmul.f32 %v1514, 1.442695
        %v1528 = vpow.pop %v1527
        %v1529 = vmul.f32 %v1515, 1.442695
        %v1530 = vpow.pop %v1529
        %v1531 = vmul.f32 %v1516, 1.442695
        %v1532 = vpow.pop %v1531
        %v1533 = vadd.f32 %v1485, %v1518
        %v1534 = vadd.f32 %v1486, %v1520
        %v1535 = vadd.f32 %v1487, %v1522
        %v1536 = vadd.f32 %v1488, %v1524
        %v1537 = vadd.f32 %v1489, %v1526
        %v1538 = vadd.f32 %v1490, %v1528
        %v1539 = vadd.f32 %v1491, %v1530
        %v1540 = vadd.f32 %v1492, %v1532
        %vm1541 = vcmp.eq.s32.totalorder %v870, 2
        %vm1542 = vcmp.eq.s32.totalorder %v871, 2
        %vm1543 = vcmp.eq.s32.totalorder %v872, 2
        %vm1544 = vcmp.eq.s32.totalorder %v873, 2
        %vm1545 = vcmp.eq.s32.totalorder %v874, 2
        %vm1546 = vcmp.eq.s32.totalorder %v875, 2
        %vm1547 = vcmp.eq.s32.totalorder %v876, 2
        %vm1548 = vcmp.eq.s32.totalorder %v877, 2
        %v1549 = vsel %vm1541, %v1272, %v1501
        %v1550 = vsel %vm1542, %v1273, %v1502
        %v1551 = vsel %vm1543, %v1274, %v1503
        %v1552 = vsel %vm1544, %v1275, %v1504
        %v1553 = vsel %vm1545, %v1276, %v1505
        %v1554 = vsel %vm1546, %v1277, %v1506
        %v1555 = vsel %vm1547, %v1278, %v1507
        %v1556 = vsel %vm1548, %v1279, %v1508
        %v1557 = vsub.f32 %v1297, %v1405
        %v1558 = vsub.f32 %v1298, %v1406
        %v1559 = vsub.f32 %v1299, %v1407
        %v1560 = vsub.f32 %v1300, %v1408
        %v1561 = vsub.f32 %v1301, %v1409
        %v1562 = vsub.f32 %v1302, %v1410
        %v1563 = vsub.f32 %v1303, %v1411
        %v1564 = vsub.f32 %v1304, %v1412
        %v1565 = vmul.f32 %v1557, 1.442695
        %v1566 = vpow.pop %v1565
        %v1567 = vmul.f32 %v1558, 1.442695
        %v1568 = vpow.pop %v1567
        %v1569 = vmul.f32 %v1559, 1.442695
        %v1570 = vpow.pop %v1569
        %v1571 = vmul.f32 %v1560, 1.442695
        %v1572 = vpow.pop %v1571
        %v1573 = vmul.f32 %v1561, 1.442695
        %v1574 = vpow.pop %v1573
        %v1575 = vmul.f32 %v1562, 1.442695
        %v1576 = vpow.pop %v1575
        %v1577 = vmul.f32 %v1563, 1.442695
        %v1578 = vpow.pop %v1577
        %v1579 = vmul.f32 %v1564, 1.442695
        %v1580 = vpow.pop %v1579
        %v1581 = vadd.f32 %v1533, %v1566
        %v1582 = vadd.f32 %v1534, %v1568
        %v1583 = vadd.f32 %v1535, %v1570
        %v1584 = vadd.f32 %v1536, %v1572
        %v1585 = vadd.f32 %v1537, %v1574
        %v1586 = vadd.f32 %v1538, %v1576
        %v1587 = vadd.f32 %v1539, %v1578
        %v1588 = vadd.f32 %v1540, %v1580
        %vm1589 = vcmp.eq.s32.totalorder %v870, 3
        %vm1590 = vcmp.eq.s32.totalorder %v871, 3
        %vm1591 = vcmp.eq.s32.totalorder %v872, 3
        %vm1592 = vcmp.eq.s32.totalorder %v873, 3
        %vm1593 = vcmp.eq.s32.totalorder %v874, 3
        %vm1594 = vcmp.eq.s32.totalorder %v875, 3
        %vm1595 = vcmp.eq.s32.totalorder %v876, 3
        %vm1596 = vcmp.eq.s32.totalorder %v877, 3
        %v1597 = vsel %vm1589, %v1297, %v1549
        %v1598 = vsel %vm1590, %v1298, %v1550
        %v1599 = vsel %vm1591, %v1299, %v1551
        %v1600 = vsel %vm1592, %v1300, %v1552
        %v1601 = vsel %vm1593, %v1301, %v1553
        %v1602 = vsel %vm1594, %v1302, %v1554
        %v1603 = vsel %vm1595, %v1303, %v1555
        %v1604 = vsel %vm1596, %v1304, %v1556
        %v1605 = vsub.f32 %v1322, %v1405
        %v1606 = vsub.f32 %v1323, %v1406
        %v1607 = vsub.f32 %v1324, %v1407
        %v1608 = vsub.f32 %v1325, %v1408
        %v1609 = vsub.f32 %v1326, %v1409
        %v1610 = vsub.f32 %v1327, %v1410
        %v1611 = vsub.f32 %v1328, %v1411
        %v1612 = vsub.f32 %v1329, %v1412
        %v1613 = vmul.f32 %v1605, 1.442695
        %v1614 = vpow.pop %v1613
        %v1615 = vmul.f32 %v1606, 1.442695
        %v1616 = vpow.pop %v1615
        %v1617 = vmul.f32 %v1607, 1.442695
        %v1618 = vpow.pop %v1617
        %v1619 = vmul.f32 %v1608, 1.442695
        %v1620 = vpow.pop %v1619
        %v1621 = vmul.f32 %v1609, 1.442695
        %v1622 = vpow.pop %v1621
        %v1623 = vmul.f32 %v1610, 1.442695
        %v1624 = vpow.pop %v1623
        %v1625 = vmul.f32 %v1611, 1.442695
        %v1626 = vpow.pop %v1625
        %v1627 = vmul.f32 %v1612, 1.442695
        %v1628 = vpow.pop %v1627
        %v1629 = vadd.f32 %v1581, %v1614
        %v1630 = vadd.f32 %v1582, %v1616
        %v1631 = vadd.f32 %v1583, %v1618
        %v1632 = vadd.f32 %v1584, %v1620
        %v1633 = vadd.f32 %v1585, %v1622
        %v1634 = vadd.f32 %v1586, %v1624
        %v1635 = vadd.f32 %v1587, %v1626
        %v1636 = vadd.f32 %v1588, %v1628
        %vm1637 = vcmp.eq.s32.totalorder %v870, 4
        %vm1638 = vcmp.eq.s32.totalorder %v871, 4
        %vm1639 = vcmp.eq.s32.totalorder %v872, 4
        %vm1640 = vcmp.eq.s32.totalorder %v873, 4
        %vm1641 = vcmp.eq.s32.totalorder %v874, 4
        %vm1642 = vcmp.eq.s32.totalorder %v875, 4
        %vm1643 = vcmp.eq.s32.totalorder %v876, 4
        %vm1644 = vcmp.eq.s32.totalorder %v877, 4
        %v1645 = vsel %vm1637, %v1322, %v1597
        %v1646 = vsel %vm1638, %v1323, %v1598
        %v1647 = vsel %vm1639, %v1324, %v1599
        %v1648 = vsel %vm1640, %v1325, %v1600
        %v1649 = vsel %vm1641, %v1326, %v1601
        %v1650 = vsel %vm1642, %v1327, %v1602
        %v1651 = vsel %vm1643, %v1328, %v1603
        %v1652 = vsel %vm1644, %v1329, %v1604
        %v1653 = vsub.f32 %v1347, %v1405
        %v1654 = vsub.f32 %v1348, %v1406
        %v1655 = vsub.f32 %v1349, %v1407
        %v1656 = vsub.f32 %v1350, %v1408
        %v1657 = vsub.f32 %v1351, %v1409
        %v1658 = vsub.f32 %v1352, %v1410
        %v1659 = vsub.f32 %v1353, %v1411
        %v1660 = vsub.f32 %v1354, %v1412
        %v1661 = vmul.f32 %v1653, 1.442695
        %v1662 = vpow.pop %v1661
        %v1663 = vmul.f32 %v1654, 1.442695
        %v1664 = vpow.pop %v1663
        %v1665 = vmul.f32 %v1655, 1.442695
        %v1666 = vpow.pop %v1665
        %v1667 = vmul.f32 %v1656, 1.442695
        %v1668 = vpow.pop %v1667
        %v1669 = vmul.f32 %v1657, 1.442695
        %v1670 = vpow.pop %v1669
        %v1671 = vmul.f32 %v1658, 1.442695
        %v1672 = vpow.pop %v1671
        %v1673 = vmul.f32 %v1659, 1.442695
        %v1674 = vpow.pop %v1673
        %v1675 = vmul.f32 %v1660, 1.442695
        %v1676 = vpow.pop %v1675
        %v1677 = vadd.f32 %v1629, %v1662
        %v1678 = vadd.f32 %v1630, %v1664
        %v1679 = vadd.f32 %v1631, %v1666
        %v1680 = vadd.f32 %v1632, %v1668
        %v1681 = vadd.f32 %v1633, %v1670
        %v1682 = vadd.f32 %v1634, %v1672
        %v1683 = vadd.f32 %v1635, %v1674
        %v1684 = vadd.f32 %v1636, %v1676
        %vm1685 = vcmp.eq.s32.totalorder %v870, 5
        %vm1686 = vcmp.eq.s32.totalorder %v871, 5
        %vm1687 = vcmp.eq.s32.totalorder %v872, 5
        %vm1688 = vcmp.eq.s32.totalorder %v873, 5
        %vm1689 = vcmp.eq.s32.totalorder %v874, 5
        %vm1690 = vcmp.eq.s32.totalorder %v875, 5
        %vm1691 = vcmp.eq.s32.totalorder %v876, 5
        %vm1692 = vcmp.eq.s32.totalorder %v877, 5
        %v1693 = vsel %vm1685, %v1347, %v1645
        %v1694 = vsel %vm1686, %v1348, %v1646
        %v1695 = vsel %vm1687, %v1349, %v1647
        %v1696 = vsel %vm1688, %v1350, %v1648
        %v1697 = vsel %vm1689, %v1351, %v1649
        %v1698 = vsel %vm1690, %v1352, %v1650
        %v1699 = vsel %vm1691, %v1353, %v1651
        %v1700 = vsel %vm1692, %v1354, %v1652
        %v1701 = vsub.f32 %v1372, %v1405
        %v1702 = vsub.f32 %v1373, %v1406
        %v1703 = vsub.f32 %v1374, %v1407
        %v1704 = vsub.f32 %v1375, %v1408
        %v1705 = vsub.f32 %v1376, %v1409
        %v1706 = vsub.f32 %v1377, %v1410
        %v1707 = vsub.f32 %v1378, %v1411
        %v1708 = vsub.f32 %v1379, %v1412
        %v1709 = vmul.f32 %v1701, 1.442695
        %v1710 = vpow.pop %v1709
        %v1711 = vmul.f32 %v1702, 1.442695
        %v1712 = vpow.pop %v1711
        %v1713 = vmul.f32 %v1703, 1.442695
        %v1714 = vpow.pop %v1713
        %v1715 = vmul.f32 %v1704, 1.442695
        %v1716 = vpow.pop %v1715
        %v1717 = vmul.f32 %v1705, 1.442695
        %v1718 = vpow.pop %v1717
        %v1719 = vmul.f32 %v1706, 1.442695
        %v1720 = vpow.pop %v1719
        %v1721 = vmul.f32 %v1707, 1.442695
        %v1722 = vpow.pop %v1721
        %v1723 = vmul.f32 %v1708, 1.442695
        %v1724 = vpow.pop %v1723
        %v1725 = vadd.f32 %v1677, %v1710
        %v1726 = vadd.f32 %v1678, %v1712
        %v1727 = vadd.f32 %v1679, %v1714
        %v1728 = vadd.f32 %v1680, %v1716
        %v1729 = vadd.f32 %v1681, %v1718
        %v1730 = vadd.f32 %v1682, %v1720
        %v1731 = vadd.f32 %v1683, %v1722
        %v1732 = vadd.f32 %v1684, %v1724
        %vm1733 = vcmp.eq.s32.totalorder %v870, 6
        %vm1734 = vcmp.eq.s32.totalorder %v871, 6
        %vm1735 = vcmp.eq.s32.totalorder %v872, 6
        %vm1736 = vcmp.eq.s32.totalorder %v873, 6
        %vm1737 = vcmp.eq.s32.totalorder %v874, 6
        %vm1738 = vcmp.eq.s32.totalorder %v875, 6
        %vm1739 = vcmp.eq.s32.totalorder %v876, 6
        %vm1740 = vcmp.eq.s32.totalorder %v877, 6
        %v1741 = vsel %vm1733, %v1372, %v1693
        %v1742 = vsel %vm1734, %v1373, %v1694
        %v1743 = vsel %vm1735, %v1374, %v1695
        %v1744 = vsel %vm1736, %v1375, %v1696
        %v1745 = vsel %vm1737, %v1376, %v1697
        %v1746 = vsel %vm1738, %v1377, %v1698
        %v1747 = vsel %vm1739, %v1378, %v1699
        %v1748 = vsel %vm1740, %v1379, %v1700
        %v1749 = vsub.f32 %v1397, %v1405
        %v1750 = vsub.f32 %v1398, %v1406
        %v1751 = vsub.f32 %v1399, %v1407
        %v1752 = vsub.f32 %v1400, %v1408
        %v1753 = vsub.f32 %v1401, %v1409
        %v1754 = vsub.f32 %v1402, %v1410
        %v1755 = vsub.f32 %v1403, %v1411
        %v1756 = vsub.f32 %v1404, %v1412
        %v1757 = vmul.f32 %v1749, 1.442695
        %v1758 = vpow.pop %v1757
        %v1759 = vmul.f32 %v1750, 1.442695
        %v1760 = vpow.pop %v1759
        %v1761 = vmul.f32 %v1751, 1.442695
        %v1762 = vpow.pop %v1761
        %v1763 = vmul.f32 %v1752, 1.442695
        %v1764 = vpow.pop %v1763
        %v1765 = vmul.f32 %v1753, 1.442695
        %v1766 = vpow.pop %v1765
        %v1767 = vmul.f32 %v1754, 1.442695
        %v1768 = vpow.pop %v1767
        %v1769 = vmul.f32 %v1755, 1.442695
        %v1770 = vpow.pop %v1769
        %v1771 = vmul.f32 %v1756, 1.442695
        %v1772 = vpow.pop %v1771
        %v1773 = vadd.f32 %v1725, %v1758
        %v1774 = vadd.f32 %v1726, %v1760
        %v1775 = vadd.f32 %v1727, %v1762
        %v1776 = vadd.f32 %v1728, %v1764
        %v1777 = vadd.f32 %v1729, %v1766
        %v1778 = vadd.f32 %v1730, %v1768
        %v1779 = vadd.f32 %v1731, %v1770
        %v1780 = vadd.f32 %v1732, %v1772
        %vm1781 = vcmp.eq.s32.totalorder %v870, 7
        %vm1782 = vcmp.eq.s32.totalorder %v871, 7
        %vm1783 = vcmp.eq.s32.totalorder %v872, 7
        %vm1784 = vcmp.eq.s32.totalorder %v873, 7
        %vm1785 = vcmp.eq.s32.totalorder %v874, 7
        %vm1786 = vcmp.eq.s32.totalorder %v875, 7
        %vm1787 = vcmp.eq.s32.totalorder %v876, 7
        %vm1788 = vcmp.eq.s32.totalorder %v877, 7
        %v1789 = vsel %vm1781, %v1397, %v1741
        %v1790 = vsel %vm1782, %v1398, %v1742
        %v1791 = vsel %vm1783, %v1399, %v1743
        %v1792 = vsel %vm1784, %v1400, %v1744
        %v1793 = vsel %vm1785, %v1401, %v1745
        %v1794 = vsel %vm1786, %v1402, %v1746
        %v1795 = vsel %vm1787, %v1403, %v1747
        %v1796 = vsel %vm1788, %v1404, %v1748
        %v1797 = vlog2.pop %v1773
        %v1798 = vmul.f32 %v1797, 0.6931472
        %v1799 = vlog2.pop %v1774
        %v1800 = vmul.f32 %v1799, 0.6931472
        %v1801 = vlog2.pop %v1775
        %v1802 = vmul.f32 %v1801, 0.6931472
        %v1803 = vlog2.pop %v1776
        %v1804 = vmul.f32 %v1803, 0.6931472
        %v1805 = vlog2.pop %v1777
        %v1806 = vmul.f32 %v1805, 0.6931472
        %v1807 = vlog2.pop %v1778
        %v1808 = vmul.f32 %v1807, 0.6931472
        %v1809 = vlog2.pop %v1779
        %v1810 = vmul.f32 %v1809, 0.6931472
        %v1811 = vlog2.pop %v1780
        %v1812 = vmul.f32 %v1811, 0.6931472
        %v1813 = vadd.f32 %v1798, %v1405
        %v1814 = vadd.f32 %v1800, %v1406
        %v1815 = vadd.f32 %v1802, %v1407
        %v1816 = vadd.f32 %v1804, %v1408
        %v1817 = vadd.f32 %v1806, %v1409
        %v1818 = vadd.f32 %v1808, %v1410
        %v1819 = vadd.f32 %v1810, %v1411
        %v1820 = vadd.f32 %v1812, %v1412
        %v1821 = vsub.f32 %v1813, %v1789
        %v1822 = vsub.f32 %v1814, %v1790
        %v1823 = vsub.f32 %v1815, %v1791
        %v1824 = vsub.f32 %v1816, %v1792
        %v1825 = vsub.f32 %v1817, %v1793
        %v1826 = vsub.f32 %v1818, %v1794
        %v1827 = vsub.f32 %v1819, %v1795
        %v1828 = vsub.f32 %v1820, %v1796
        %v1829 = vmul.f32 %v982, %v894
        %v1830 = vmul.f32 %v983, %v895
        %v1831 = vmul.f32 %v984, %v896
        %v1832 = vmul.f32 %v985, %v897
        %v1833 = vmul.f32 %v986, %v898
        %v1834 = vmul.f32 %v987, %v899
        %v1835 = vmul.f32 %v988, %v900
        %v1836 = vmul.f32 %v989, %v901
        %v1837 = vadd.f32 %v1829, %v1830
        %v1838 = vadd.f32 %v1837, %v1831
        %v1839 = vadd.f32 %v1838, %v1832
        %v1840 = vadd.f32 %v1839, %v1833
        %v1841 = vadd.f32 %v1840, %v1834
        %v1842 = vadd.f32 %v1841, %v1835
        %v1843 = vadd.f32 %v1842, %v1836
        %v1844 = vrot.slane %v1843, 4
        %v1845 = vadd.f32 %v1843, %v1844
        %v1846 = vrot.slane %v1845, 2
        %v1847 = vadd.f32 %v1845, %v1846
        %v1848 = vrot.slane %v1847, 1
        %v1849 = vadd.f32 %v1847, %v1848
        %1850 = vst [vmem:[%s796] sm:$0x1] %v1849
        %v1851 = vmul.f32 %v1214, %v894
        %v1852 = vmul.f32 %v1215, %v895
        %v1853 = vmul.f32 %v1216, %v896
        %v1854 = vmul.f32 %v1217, %v897
        %v1855 = vmul.f32 %v1218, %v898
        %v1856 = vmul.f32 %v1219, %v899
        %v1857 = vmul.f32 %v1220, %v900
        %v1858 = vmul.f32 %v1221, %v901
        %v1859 = vadd.f32 %v1851, %v1852
        %v1860 = vadd.f32 %v1859, %v1853
        %v1861 = vadd.f32 %v1860, %v1854
        %v1862 = vadd.f32 %v1861, %v1855
        %v1863 = vadd.f32 %v1862, %v1856
        %v1864 = vadd.f32 %v1863, %v1857
        %v1865 = vadd.f32 %v1864, %v1858
        %v1866 = vrot.slane %v1865, 4
        %v1867 = vadd.f32 %v1865, %v1866
        %v1868 = vrot.slane %v1867, 2
        %v1869 = vadd.f32 %v1867, %v1868
        %v1870 = vrot.slane %v1869, 1
        %v1871 = vadd.f32 %v1869, %v1870
        %1872 = vst [vmem:[%s796 + $0x1] sm:$0x1] %v1871
        %v1873 = vadd.f32 %v894, %v895
        %v1874 = vadd.f32 %v1873, %v896
        %v1875 = vadd.f32 %v1874, %v897
        %v1876 = vadd.f32 %v1875, %v898
        %v1877 = vadd.f32 %v1876, %v899
        %v1878 = vadd.f32 %v1877, %v900
        %v1879 = vadd.f32 %v1878, %v901
        %v1880 = vrot.slane %v1879, 4
        %v1881 = vadd.f32 %v1879, %v1880
        %v1882 = vrot.slane %v1881, 2
        %v1883 = vadd.f32 %v1881, %v1882
        %v1884 = vrot.slane %v1883, 1
        %v1885 = vadd.f32 %v1883, %v1884
        %1886 = vst [vmem:[%s796 + $0x2] sm:$0x1] %v1885
        %v1887 = vadd.f32 %v1821, %v1822
        %v1888 = vadd.f32 %v1887, %v1823
        %v1889 = vadd.f32 %v1888, %v1824
        %v1890 = vadd.f32 %v1889, %v1825
        %v1891 = vadd.f32 %v1890, %v1826
        %v1892 = vadd.f32 %v1891, %v1827
        %v1893 = vadd.f32 %v1892, %v1828
        %v1894 = vrot.slane %v1893, 4
        %v1895 = vadd.f32 %v1893, %v1894
        %v1896 = vrot.slane %v1895, 2
        %v1897 = vadd.f32 %v1895, %v1896
        %v1898 = vrot.slane %v1897, 1
        %v1899 = vadd.f32 %v1897, %v1898
        %1900 = vst [vmem:[%s796 + $0x3] sm:$0x1] %v1899
        %1901 = vst [vmem:[%s796 + $0x4] sm:$0xf] 0.0
        %p1902 = scmp.eq.s32.totalorder %s14, 1
        // Predicated region
        $region112: #{box_loss_forward.1} parent=102 // pred_check
          %p1903 = pneg %p1902
        $region113: #{box_loss_forward.1} parent=102 // pred_check_branch
          %1905 = sbr.rel (%p1903) target = $region115
        $region114: #{box_loss_forward.1} parent=102 // pred_region
          %v1906 = vlaneseq
          %v1907 = vshrl.u32 %v1906, 7
          %v1908 = vadd.s32 %v1907, 8
          %v1909 = vadd.s32 %v1907, 16
          %v1910 = vadd.s32 %v1907, 24
          %v1911 = vadd.s32 %v1907, 32
          %v1912 = vadd.s32 %v1907, 40
          %v1913 = vadd.s32 %v1907, 48
          %v1914 = vadd.s32 %v1907, 56
          %v1915 = vlaneseq
          %v1916 = vand.u32 %v1915, 127
          %s1917 = smul.u32 %s14, 64
          %v1918 = vstv %s1917
          %v1919 = vadd.s32 %v1918, %v1907
          %v1920 = vadd.s32 %v1918, %v1908
          %v1921 = vadd.s32 %v1918, %v1909
          %v1922 = vadd.s32 %v1918, %v1910
          %v1923 = vadd.s32 %v1918, %v1911
          %v1924 = vadd.s32 %v1918, %v1912
          %v1925 = vadd.s32 %v1918, %v1913
          %v1926 = vadd.s32 %v1918, %v1914
          %v1927 = vmul.u32 %v1919, 128
          %v1928 = vmul.u32 %v1920, 128
          %v1929 = vmul.u32 %v1921, 128
          %v1930 = vmul.u32 %v1922, 128
          %v1931 = vmul.u32 %v1923, 128
          %v1932 = vmul.u32 %v1924, 128
          %v1933 = vmul.u32 %v1925, 128
          %v1934 = vmul.u32 %v1926, 128
          %v1935 = vadd.s32 %v1927, %v1916
          %v1936 = vadd.s32 %v1928, %v1916
          %v1937 = vadd.s32 %v1929, %v1916
          %v1938 = vadd.s32 %v1930, %v1916
          %v1939 = vadd.s32 %v1931, %v1916
          %v1940 = vadd.s32 %v1932, %v1916
          %v1941 = vadd.s32 %v1933, %v1916
          %v1942 = vadd.s32 %v1934, %v1916
          %vm1943 = vcmp.lt.s32.totalorder %v1935, 16384
          %vm1944 = vcmp.lt.s32.totalorder %v1936, 16384
          %vm1945 = vcmp.lt.s32.totalorder %v1937, 16384
          %vm1946 = vcmp.lt.s32.totalorder %v1938, 16384
          %vm1947 = vcmp.lt.s32.totalorder %v1939, 16384
          %vm1948 = vcmp.lt.s32.totalorder %v1940, 16384
          %vm1949 = vcmp.lt.s32.totalorder %v1941, 16384
          %vm1950 = vcmp.lt.s32.totalorder %v1942, 16384
          %v1951 = vsel %vm1943, 1, 0
          %v1952 = vsel %vm1944, 1, 0
          %v1953 = vsel %vm1945, 1, 0
          %v1954 = vsel %vm1946, 1, 0
          %v1955 = vsel %vm1947, 1, 0
          %v1956 = vsel %vm1948, 1, 0
          %v1957 = vsel %vm1949, 1, 0
          %v1958 = vsel %vm1950, 1, 0
          %v1959 = vcvt.s32.f32 %v1951
          %v1960 = vcvt.s32.f32 %v1952
          %v1961 = vcvt.s32.f32 %v1953
          %v1962 = vcvt.s32.f32 %v1954
          %v1963 = vcvt.s32.f32 %v1955
          %v1964 = vcvt.s32.f32 %v1956
          %v1965 = vcvt.s32.f32 %v1957
          %v1966 = vcvt.s32.f32 %v1958
          %v1967 = vmul.f32 %v1821, %v1959
          %v1968 = vmul.f32 %v1822, %v1960
          %v1969 = vmul.f32 %v1823, %v1961
          %v1970 = vmul.f32 %v1824, %v1962
          %v1971 = vmul.f32 %v1825, %v1963
          %v1972 = vmul.f32 %v1826, %v1964
          %v1973 = vmul.f32 %v1827, %v1965
          %v1974 = vmul.f32 %v1828, %v1966
          %v1975 = vadd.f32 %v1967, %v1968
          %v1976 = vadd.f32 %v1975, %v1969
          %v1977 = vadd.f32 %v1976, %v1970
          %v1978 = vadd.f32 %v1977, %v1971
          %v1979 = vadd.f32 %v1978, %v1972
          %v1980 = vadd.f32 %v1979, %v1973
          %v1981 = vadd.f32 %v1980, %v1974
          %v1982 = vrot.slane %v1981, 4
          %v1983 = vadd.f32 %v1981, %v1982
          %v1984 = vrot.slane %v1983, 2
          %v1985 = vadd.f32 %v1983, %v1984
          %v1986 = vrot.slane %v1985, 1
          %v1987 = vadd.f32 %v1985, %v1986
          %1988 = vst [vmem:[%s796 + $0x3] sm:$0x1] %v1987
        $region115: #{box_loss_forward.1} parent=102 // pred_fallthru
          _
        %p1989 = scmp.lt.s32.totalorder %s14, 1
        %s1990 = scalar_select %p1989, %s14, 1
        %s1991 = smul.addr %s1990, 8
        %s1992 = scalar_lea.vmem %s3, %s1991
        // Predicated region
        $region116: #{box_loss_forward.1} parent=102 // pred_check
          %p1993 = pneg %p110
        $region117: #{box_loss_forward.1} parent=102 // pred_check_branch
          %1995 = sbr.rel (%p1993) target = $region119
        $region118: #{box_loss_forward.1} parent=102 // pred_region
          _
        $region119: #{box_loss_forward.1} parent=102 // pred_fallthru
          _
      $region103: #{box_loss_forward.1} parent=5 // pred_fallthru
        _
      %p1996 = scmp.le.s32.totalorder 2, %s9
      // Predicated region
      $region120: #{box_loss_forward.1} parent=5 // pred_check
        %p1997 = pneg %p1996
      $region121: #{box_loss_forward.1} parent=5 // pred_check_branch
        %1999 = sbr.rel (%p1997) target = $region123
      $region122: #{box_loss_forward.1} parent=5 // pred_region
        %s2000 = ssub.s32 %s9, 2
        // Predicated region
        $region124: #{box_loss_forward.1} parent=122 // pred_check
          %p2001 = pneg %p116
        $region125: #{box_loss_forward.1} parent=122 // pred_check_branch
          %2003 = sbr.rel (%p2001) target = $region127
        $region126: #{box_loss_forward.1} parent=122 // pred_region
          %p2004 = scmp.lt.s32.totalorder %s15, 1
          %s2005 = scalar_select %p2004, %s15, 1
          %s2006 = smul.addr %s2005, 8
          %s2007 = scalar_lea.vmem %s3, %s2006
        $region127: #{box_loss_forward.1} parent=122 // pred_fallthru
          _
      $region123: #{box_loss_forward.1} parent=5 // pred_fallthru
        _
    $region6: #{box_loss_forward.1} parent=1 // loop_footer
      %s13 = sadd.s32 1, %s9
    $region7: #{box_loss_forward.1} parent=1 // loop_footer_branch
      %8 = sbr.rel target = $region3
    $region8: #{box_loss_forward.1} parent=1 // loop_exit
      _

</llo_original>
